<compile_context>
chip_gen: v6e
topology: v6e:2x2x1
jax: 0.10.0
libtpu: 0.0.40
codegen_flags: <defaults>
</compile_context>

<pallas_src>
import functools

import numpy as np
import jax
import jax.numpy as jnp
from jax.experimental import pallas as pl
from jax.experimental.pallas import tpu as pltpu


# ----------------------------------------------------------------------------- #
# Pallas kernel
# ----------------------------------------------------------------------------- #
def _mhca_kernel(*refs, n_heads, head_size, seq_len, b_blk, has_mask):
    if has_mask:
        (xd_ref, xe_ref, mask_ref,
         wq_ref, bq_ref, wk_ref, bk_ref, wv_ref, bv_ref, wo_ref, bo_ref,
         out_ref, cat_ref) = refs
    else:
        (xd_ref, xe_ref,
         wq_ref, bq_ref, wk_ref, bk_ref, wv_ref, bv_ref, wo_ref, bo_ref,
         out_ref, cat_ref) = refs
        mask_ref = None

    T = seq_len
    hs = head_size
    scale = 1.0 / float(hs) ** 0.5

    xd = xd_ref[...]                       # (b_blk*T, C) bf16  -> Q
    xe = xe_ref[...]                       # (b_blk*T, C) bf16  -> K, V

    # Projections: bf16 MXU operands, f32 accumulation.  Fold the softmax scale
    # into q once (T*C multiplies instead of H*T^2 per-score multiplies).
    q = (jnp.dot(xd, wq_ref[...], preferred_element_type=jnp.float32)
         + bq_ref[...]) * scale
    k = jnp.dot(xe, wk_ref[...], preferred_element_type=jnp.float32) + bk_ref[...]
    v = jnp.dot(xe, wv_ref[...], preferred_element_type=jnp.float32) + bv_ref[...]

    q = q.astype(jnp.bfloat16)
    k = k.astype(jnp.bfloat16)
    v = v.astype(jnp.bfloat16)

    # Per (batch, head) attention.  Static loops are fine at b_blk*n_heads this
    # small; for production n_heads/T convert to lax.fori_loop + flash-style
    # query tiling to bound live ranges and fit v7x's 64 MiB VMEM.
    for b in range(b_blk):
        r0 = b * T
        if has_mask:
            m_b = mask_ref[r0:r0 + T, :]                       # (T, T) f32
        for h in range(n_heads):
            c0 = h * hs
            q_h = q[r0:r0 + T, c0:c0 + hs]                     # (T, hs) bf16
            k_h = k[r0:r0 + T, c0:c0 + hs]
            v_h = v[r0:r0 + T, c0:c0 + hs]

            s = jnp.einsum('td,sd->ts', q_h, k_h,
                           preferred_element_type=jnp.float32)  # (T, T) f32
            if has_mask:
                s = s + m_b

            # Numerically-stable softmax in f32; normalization deferred so the
            # divide becomes one (T,1) approx-reciprocal + a (T,hs) multiply.
            m = jnp.max(s, axis=-1, keepdims=True)
            p = jnp.exp(s - m)
            l = jnp.sum(p, axis=-1, keepdims=True)
            o = jnp.dot(p.astype(jnp.bfloat16), v_h,
                        preferred_element_type=jnp.float32)     # (T, hs) f32
            o = o * pl.reciprocal(l, approx=True)

            # Assemble the head-concat buffer (replaces per-head Wo matmuls).
            cat_ref[r0:r0 + T, c0:c0 + hs] = o

    # Single concat-then-project matmul over all rows and all heads.
    res = jnp.dot(cat_ref[...].astype(jnp.bfloat16), wo_ref[...],
                  preferred_element_type=jnp.float32) + bo_ref[...]
    out_ref[...] = res.astype(out_ref.dtype)


# ----------------------------------------------------------------------------- #
# Wrapper
# ----------------------------------------------------------------------------- #
def multi_head_ca(x_enc, x_dec, params, n_heads, mask=None, b_blk=None):
    """x_enc, x_dec: (B, T, C) float32; mask: optional (B, T, T) additive mask."""
    B, T, C = x_enc.shape
    assert C % n_heads == 0, 'Invalid head size for the given d_model'
    hs = C // n_heads
    wq, bq, wkv, bkv, wo, bo = params
    has_mask = mask is not None
    out_dtype = x_dec.dtype

    # Split the fused KV projection host-side so K and V land in contiguous,
    # head-ordered column blocks (matches PyTorch reshape/permute/chunk order).
    cols = np.arange(2 * C).reshape(n_heads, 2, hs)
    cols_k = cols[:, 0, :].reshape(-1)
    cols_v = cols[:, 1, :].reshape(-1)
    wk, bk = wkv[:, cols_k], bkv[cols_k]
    wv, bv = wkv[:, cols_v], bkv[cols_v]

    # How many batch elements per grid step: biggest divisor of B that keeps
    # the projection matmuls at <= ~512 rows (fills the MXU, amortizes the
    # per-step fixed overhead).  At the test shape this is the whole batch.
    if b_blk is None:
        b_blk = 1
        for cand in range(1, B + 1):
            if B % cand == 0 and cand * T <= max(512, T):
                b_blk = cand
    assert B % b_blk == 0
    n_steps = B // b_blk
    rows = b_blk * T

    # bf16 MXU operands (halves DMA + resident weight VMEM); f32 biases.
    bf16 = lambda a: a.astype(jnp.bfloat16)
    xd_flat = bf16(x_dec).reshape(B * T, C)      # free HBM reshapes
    xe_flat = bf16(x_enc).reshape(B * T, C)

    inputs = [xd_flat, xe_flat]
    in_specs = [pl.BlockSpec((rows, C), lambda i: (i, 0)),
                pl.BlockSpec((rows, C), lambda i: (i, 0))]
    if has_mask:
        inputs.append(mask.astype(jnp.float32).reshape(B * T, T))
        in_specs.append(pl.BlockSpec((rows, T), lambda i: (i, 0)))

    def w_spec(r, c):
        # Constant index_map: weights DMA'd once, stay resident across steps.
        return pl.BlockSpec((r, c), lambda i: (0, 0))

    weights = [bf16(wq), bq.reshape(1, C).astype(jnp.float32),
               bf16(wk), bk.reshape(1, C).astype(jnp.float32),
               bf16(wv), bv.reshape(1, C).astype(jnp.float32),
               bf16(wo), bo.reshape(1, C).astype(jnp.float32)]
    inputs += weights
    in_specs += [w_spec(C, C), w_spec(1, C)] * 4

    kernel = functools.partial(_mhca_kernel, n_heads=n_heads, head_size=hs,
                               seq_len=T, b_blk=b_blk, has_mask=has_mask)

    # Explicit scoped-VMEM budget: double-buffered activation/mask blocks,
    # resident weights (2 buffers each), output block, concat scratch, headroom.
    def _nb(a):
        return int(np.prod(a.shape)) * jnp.dtype(a.dtype).itemsize
    act_bytes = 2 * sum(_nb(a) for a in inputs[:2 + int(has_mask)]) // n_steps
    weight_bytes = 2 * sum(_nb(a) for a in weights)
    out_bytes = 2 * rows * C * jnp.dtype(out_dtype).itemsize
    scratch_bytes = rows * C * 4
    vmem_limit = int(min(64 << 20,
                         max(8 << 20, 2 * (act_bytes + weight_bytes
                                           + out_bytes + scratch_bytes))))

    out_flat = pl.pallas_call(
        kernel,
        out_shape=jax.ShapeDtypeStruct((B * T, C), out_dtype),
        grid_spec=pltpu.PrefetchScalarGridSpec(
            num_scalar_prefetch=0,
            grid=(n_steps,),
            in_specs=in_specs,
            out_specs=pl.BlockSpec((rows, C), lambda i: (i, 0)),
            scratch_shapes=[pltpu.VMEM((rows, C), jnp.float32)],  # head concat
        ),
        compiler_params=pltpu.CompilerParams(
            dimension_semantics=("parallel",),   # batch blocks independent
            vmem_limit_bytes=vmem_limit,
        ),
    )(*inputs)
    return out_flat.reshape(B, T, C)


# ----------------------------------------------------------------------------- #
# Pure-JAX reference (mirrors the PyTorch forward exactly, f32)
# ----------------------------------------------------------------------------- #
def ref_mhca(x_enc, x_dec, params, n_heads, mask=None):
    wq, bq, wkv, bkv, wo, bo = params
    B, T, C = x_enc.shape
    hs = C // n_heads
    q = x_dec @ wq + bq
    kv = x_enc @ wkv + bkv
    q = q.reshape(B, T, n_heads, hs).transpose(0, 2, 1, 3)
    kv = kv.reshape(B, T, n_heads, 2 * hs).transpose(0, 2, 1, 3)
    k, v = kv[..., :hs], kv[..., hs:]
    s = jnp.einsum('bhtd,bhsd->bhts', q, k) / (hs ** 0.5)
    if mask is not None:
        s = s + mask[:, None]
    p = jax.nn.softmax(s, axis=-1)
    o = jnp.einsum('bhts,bhsd->bhtd', p, v)
    o = o.transpose(0, 2, 1, 3).reshape(B, T, C)
    return o @ wo + bo


# ----------------------------------------------------------------------------- #
# main
# ----------------------------------------------------------------------------- #
if __name__ == "__main__":
    B, T, d_model, n_heads = 2, 8, 32, 4

    key = jax.random.PRNGKey(0)
    ks = jax.random.split(key, 8)
    w_scale = 0.05
    x_enc = jax.random.normal(ks[0], (B, T, d_model), jnp.float32)
    x_dec = jax.random.normal(ks[1], (B, T, d_model), jnp.float32)
    wq = jax.random.normal(ks[2], (d_model, d_model), jnp.float32) * w_scale
    bq = jax.random.normal(ks[3], (d_model,), jnp.float32) * w_scale
    wkv = jax.random.normal(ks[4], (d_model, 2 * d_model), jnp.float32) * w_scale
    bkv = jax.random.normal(ks[5], (2 * d_model,), jnp.float32) * w_scale
    wo = jax.random.normal(ks[6], (d_model, d_model), jnp.float32) * w_scale
    bo = jax.random.normal(ks[7], (d_model,), jnp.float32) * w_scale
    params = (wq, bq, wkv, bkv, wo, bo)

    # Tolerances relaxed vs. f32 reference: bf16 MXU operands + approx reciprocal.
    TOL = dict(atol=2e-2, rtol=2e-2)

    # mask=None path
    out = jax.block_until_ready(multi_head_ca(x_enc, x_dec, params, n_heads))
    ref = ref_mhca(x_enc, x_dec, params, n_heads)
    assert out.shape == (B, T, d_model)
    assert bool(jnp.all(jnp.isfinite(out)))
    assert bool(jnp.allclose(out, ref, **TOL)), float(jnp.max(jnp.abs(out - ref)))

    # additive-mask path (e.g. padding on the encoder side of batch 1)
    mask = jnp.zeros((B, T, T), jnp.float32)
    mask = mask.at[1, :, T - 3:].set(-1e9)
    out_m = jax.block_until_ready(
        multi_head_ca(x_enc, x_dec, params, n_heads, mask=mask))
    ref_m = ref_mhca(x_enc, x_dec, params, n_heads, mask=mask)
    assert bool(jnp.allclose(out_m, ref_m, **TOL)), \
        float(jnp.max(jnp.abs(out_m - ref_m)))

    print("KERNEL_OK")
</pallas_src>

<mosaic_0001>
module attributes {stable_mosaic.version = 11 : i64} {
  func.func @_mhca_kernel(%arg0: i32, %arg1: memref<16x32xbf16, #tpu.memory_space<vmem>>, %arg2: memref<16x32xbf16, #tpu.memory_space<vmem>>, %arg3: memref<32x32xbf16, #tpu.memory_space<vmem>>, %arg4: memref<1x32xf32, #tpu.memory_space<vmem>>, %arg5: memref<32x32xbf16, #tpu.memory_space<vmem>>, %arg6: memref<1x32xf32, #tpu.memory_space<vmem>>, %arg7: memref<32x32xbf16, #tpu.memory_space<vmem>>, %arg8: memref<1x32xf32, #tpu.memory_space<vmem>>, %arg9: memref<32x32xbf16, #tpu.memory_space<vmem>>, %arg10: memref<1x32xf32, #tpu.memory_space<vmem>>, %arg11: memref<16x32xf32, #tpu.memory_space<vmem>>, %arg12: memref<16x32xf32, #tpu.memory_space<vmem>>) attributes {dimension_semantics = [#tpu.dimension_semantics<parallel>], iteration_bounds = array<i64: 1>, scalar_prefetch = 0 : i64, scratch_operands = 1 : i64, tpu.core_type = #tpu.core_type<tc>, window_params = [{transform_indices = @transform_0, window_bounds = array<i64: 16, 32>}, {transform_indices = @transform_1, window_bounds = array<i64: 16, 32>}, {pipeline_mode = #tpu.pipeline_mode<synchronous>, transform_indices = @transform_2, window_bounds = array<i64: 32, 32>}, {pipeline_mode = #tpu.pipeline_mode<synchronous>, transform_indices = @transform_3, window_bounds = array<i64: 1, 32>}, {pipeline_mode = #tpu.pipeline_mode<synchronous>, transform_indices = @transform_4, window_bounds = array<i64: 32, 32>}, {pipeline_mode = #tpu.pipeline_mode<synchronous>, transform_indices = @transform_5, window_bounds = array<i64: 1, 32>}, {pipeline_mode = #tpu.pipeline_mode<synchronous>, transform_indices = @transform_6, window_bounds = array<i64: 32, 32>}, {pipeline_mode = #tpu.pipeline_mode<synchronous>, transform_indices = @transform_7, window_bounds = array<i64: 1, 32>}, {pipeline_mode = #tpu.pipeline_mode<synchronous>, transform_indices = @transform_8, window_bounds = array<i64: 32, 32>}, {pipeline_mode = #tpu.pipeline_mode<synchronous>, transform_indices = @transform_9, window_bounds = array<i64: 1, 32>}, {transform_indices = @transform_10, window_bounds = array<i64: 16, 32>}]} {
    %c0 = arith.constant 0 : index
    %c0_0 = arith.constant 0 : index
    %0 = vector.load %arg1[%c0, %c0_0] : memref<16x32xbf16, #tpu.memory_space<vmem>>, vector<16x32xbf16>
    %c0_1 = arith.constant 0 : index
    %c0_2 = arith.constant 0 : index
    %1 = vector.load %arg2[%c0_1, %c0_2] : memref<16x32xbf16, #tpu.memory_space<vmem>>, vector<16x32xbf16>
    %c0_3 = arith.constant 0 : index
    %c0_4 = arith.constant 0 : index
    %2 = vector.load %arg3[%c0_3, %c0_4] : memref<32x32xbf16, #tpu.memory_space<vmem>>, vector<32x32xbf16>
    %cst = arith.constant dense<0.000000e+00> : vector<16x32xf32>
    %3 = tpu.matmul %0, %2, %cst {dimension_numbers = #tpu.dot_dimension_numbers<[1], [0], [0], [1], [0, 0, 1, 1], [], []>} : vector<16x32xbf16>, vector<32x32xbf16>, vector<16x32xf32> -> vector<16x32xf32>
    %c0_5 = arith.constant 0 : index
    %c0_6 = arith.constant 0 : index
    %4 = vector.load %arg4[%c0_5, %c0_6] : memref<1x32xf32, #tpu.memory_space<vmem>>, vector<1x32xf32>
    %5 = vector.broadcast %4 : vector<1x32xf32> to vector<16x32xf32>
    %6 = arith.addf %3, %5 : vector<16x32xf32>
    %cst_7 = arith.constant 0.353553385 : f32
    %7 = vector.broadcast %cst_7 : f32 to vector<16x32xf32>
    %8 = arith.mulf %6, %7 : vector<16x32xf32>
    %c0_8 = arith.constant 0 : index
    %c0_9 = arith.constant 0 : index
    %9 = vector.load %arg5[%c0_8, %c0_9] : memref<32x32xbf16, #tpu.memory_space<vmem>>, vector<32x32xbf16>
    %cst_10 = arith.constant dense<0.000000e+00> : vector<16x32xf32>
    %10 = tpu.matmul %1, %9, %cst_10 {dimension_numbers = #tpu.dot_dimension_numbers<[1], [0], [0], [1], [0, 0, 1, 1], [], []>} : vector<16x32xbf16>, vector<32x32xbf16>, vector<16x32xf32> -> vector<16x32xf32>
    %c0_11 = arith.constant 0 : index
    %c0_12 = arith.constant 0 : index
    %11 = vector.load %arg6[%c0_11, %c0_12] : memref<1x32xf32, #tpu.memory_space<vmem>>, vector<1x32xf32>
    %12 = vector.broadcast %11 : vector<1x32xf32> to vector<16x32xf32>
    %13 = arith.addf %10, %12 : vector<16x32xf32>
    %c0_13 = arith.constant 0 : index
    %c0_14 = arith.constant 0 : index
    %14 = vector.load %arg7[%c0_13, %c0_14] : memref<32x32xbf16, #tpu.memory_space<vmem>>, vector<32x32xbf16>
    %cst_15 = arith.constant dense<0.000000e+00> : vector<16x32xf32>
    %15 = tpu.matmul %1, %14, %cst_15 {dimension_numbers = #tpu.dot_dimension_numbers<[1], [0], [0], [1], [0, 0, 1, 1], [], []>} : vector<16x32xbf16>, vector<32x32xbf16>, vector<16x32xf32> -> vector<16x32xf32>
    %c0_16 = arith.constant 0 : index
    %c0_17 = arith.constant 0 : index
    %16 = vector.load %arg8[%c0_16, %c0_17] : memref<1x32xf32, #tpu.memory_space<vmem>>, vector<1x32xf32>
    %17 = vector.broadcast %16 : vector<1x32xf32> to vector<16x32xf32>
    %18 = arith.addf %15, %17 : vector<16x32xf32>
    %19 = arith.truncf %8 : vector<16x32xf32> to vector<16x32xbf16>
    %20 = arith.truncf %13 : vector<16x32xf32> to vector<16x32xbf16>
    %21 = arith.truncf %18 : vector<16x32xf32> to vector<16x32xbf16>
    %22 = vector.extract_strided_slice %19 {offsets = [0, 0], sizes = [8, 8], strides = [1, 1]} : vector<16x32xbf16> to vector<8x8xbf16>
    %23 = vector.extract_strided_slice %20 {offsets = [0, 0], sizes = [8, 8], strides = [1, 1]} : vector<16x32xbf16> to vector<8x8xbf16>
    %24 = vector.extract_strided_slice %21 {offsets = [0, 0], sizes = [8, 8], strides = [1, 1]} : vector<16x32xbf16> to vector<8x8xbf16>
    "tpu.trace_start"() <{level = 10 : i32, message = "td,sd->ts"}> : () -> ()
    %cst_18 = arith.constant dense<0.000000e+00> : vector<8x8xf32>
    %25 = tpu.matmul %22, %23, %cst_18 {dimension_numbers = #tpu.dot_dimension_numbers<[1], [1], [0], [0], [0, 0, 1, 0], [], []>} : vector<8x8xbf16>, vector<8x8xbf16>, vector<8x8xf32> -> vector<8x8xf32>
    "tpu.trace_stop"() : () -> ()
    %cst_19 = arith.constant dense<0xFF800000> : vector<8xf32>
    %26 = vector.multi_reduction <maximumf>, %25, %cst_19 [1] : vector<8x8xf32> to vector<8xf32>
    %27 = vector.shape_cast %26 : vector<8xf32> to vector<8x1xf32>
    %28 = vector.broadcast %27 : vector<8x1xf32> to vector<8x8xf32>
    %29 = arith.subf %25, %28 : vector<8x8xf32>
    %30 = math.exp %29 : vector<8x8xf32>
    %cst_20 = arith.constant dense<0.000000e+00> : vector<8xf32>
    %31 = vector.multi_reduction <add>, %30, %cst_20 [1] : vector<8x8xf32> to vector<8xf32>
    %32 = vector.shape_cast %31 : vector<8xf32> to vector<8x1xf32>
    %33 = arith.truncf %30 : vector<8x8xf32> to vector<8x8xbf16>
    %cst_21 = arith.constant dense<0.000000e+00> : vector<8x8xf32>
    %34 = tpu.matmul %33, %24, %cst_21 {dimension_numbers = #tpu.dot_dimension_numbers<[1], [0], [0], [1], [0, 0, 1, 1], [], []>} : vector<8x8xbf16>, vector<8x8xbf16>, vector<8x8xf32> -> vector<8x8xf32>
    %35 = tpu.reciprocal %32 {approx = true} : vector<8x1xf32> -> vector<8x1xf32>
    %36 = vector.broadcast %35 : vector<8x1xf32> to vector<8x8xf32>
    %37 = arith.mulf %34, %36 : vector<8x8xf32>
    %c0_22 = arith.constant 0 : index
    %c0_23 = arith.constant 0 : index
    %38 = vector.load %arg12[%c0_22, %c0_23] : memref<16x32xf32, #tpu.memory_space<vmem>>, vector<8x8xf32>
    tpu.vector_store %arg12[%c0_22, %c0_23], %37 {strides = array<i32>} : memref<16x32xf32, #tpu.memory_space<vmem>>, vector<8x8xf32>,
    %39 = vector.extract_strided_slice %19 {offsets = [0, 8], sizes = [8, 8], strides = [1, 1]} : vector<16x32xbf16> to vector<8x8xbf16>
    %40 = vector.extract_strided_slice %20 {offsets = [0, 8], sizes = [8, 8], strides = [1, 1]} : vector<16x32xbf16> to vector<8x8xbf16>
    %41 = vector.extract_strided_slice %21 {offsets = [0, 8], sizes = [8, 8], strides = [1, 1]} : vector<16x32xbf16> to vector<8x8xbf16>
    "tpu.trace_start"() <{level = 10 : i32, message = "td,sd->ts"}> : () -> ()
    %cst_24 = arith.constant dense<0.000000e+00> : vector<8x8xf32>
    %42 = tpu.matmul %39, %40, %cst_24 {dimension_numbers = #tpu.dot_dimension_numbers<[1], [1], [0], [0], [0, 0, 1, 0], [], []>} : vector<8x8xbf16>, vector<8x8xbf16>, vector<8x8xf32> -> vector<8x8xf32>
    "tpu.trace_stop"() : () -> ()
    %cst_25 = arith.constant dense<0xFF800000> : vector<8xf32>
    %43 = vector.multi_reduction <maximumf>, %42, %cst_25 [1] : vector<8x8xf32> to vector<8xf32>
    %44 = vector.shape_cast %43 : vector<8xf32> to vector<8x1xf32>
    %45 = vector.broadcast %44 : vector<8x1xf32> to vector<8x8xf32>
    %46 = arith.subf %42, %45 : vector<8x8xf32>
    %47 = math.exp %46 : vector<8x8xf32>
    %cst_26 = arith.constant dense<0.000000e+00> : vector<8xf32>
    %48 = vector.multi_reduction <add>, %47, %cst_26 [1] : vector<8x8xf32> to vector<8xf32>
    %49 = vector.shape_cast %48 : vector<8xf32> to vector<8x1xf32>
    %50 = arith.truncf %47 : vector<8x8xf32> to vector<8x8xbf16>
    %cst_27 = arith.constant dense<0.000000e+00> : vector<8x8xf32>
    %51 = tpu.matmul %50, %41, %cst_27 {dimension_numbers = #tpu.dot_dimension_numbers<[1], [0], [0], [1], [0, 0, 1, 1], [], []>} : vector<8x8xbf16>, vector<8x8xbf16>, vector<8x8xf32> -> vector<8x8xf32>
    %52 = tpu.reciprocal %49 {approx = true} : vector<8x1xf32> -> vector<8x1xf32>
    %53 = vector.broadcast %52 : vector<8x1xf32> to vector<8x8xf32>
    %54 = arith.mulf %51, %53 : vector<8x8xf32>
    %c0_28 = arith.constant 0 : index
    %c8 = arith.constant 8 : index
    %55 = vector.load %arg12[%c0_28, %c8] : memref<16x32xf32, #tpu.memory_space<vmem>>, vector<8x8xf32>
    tpu.vector_store %arg12[%c0_28, %c8], %54 {strides = array<i32>} : memref<16x32xf32, #tpu.memory_space<vmem>>, vector<8x8xf32>,
    %56 = vector.extract_strided_slice %19 {offsets = [0, 16], sizes = [8, 8], strides = [1, 1]} : vector<16x32xbf16> to vector<8x8xbf16>
    %57 = vector.extract_strided_slice %20 {offsets = [0, 16], sizes = [8, 8], strides = [1, 1]} : vector<16x32xbf16> to vector<8x8xbf16>
    %58 = vector.extract_strided_slice %21 {offsets = [0, 16], sizes = [8, 8], strides = [1, 1]} : vector<16x32xbf16> to vector<8x8xbf16>
    "tpu.trace_start"() <{level = 10 : i32, message = "td,sd->ts"}> : () -> ()
    %cst_29 = arith.constant dense<0.000000e+00> : vector<8x8xf32>
    %59 = tpu.matmul %56, %57, %cst_29 {dimension_numbers = #tpu.dot_dimension_numbers<[1], [1], [0], [0], [0, 0, 1, 0], [], []>} : vector<8x8xbf16>, vector<8x8xbf16>, vector<8x8xf32> -> vector<8x8xf32>
    "tpu.trace_stop"() : () -> ()
    %cst_30 = arith.constant dense<0xFF800000> : vector<8xf32>
    %60 = vector.multi_reduction <maximumf>, %59, %cst_30 [1] : vector<8x8xf32> to vector<8xf32>
    %61 = vector.shape_cast %60 : vector<8xf32> to vector<8x1xf32>
    %62 = vector.broadcast %61 : vector<8x1xf32> to vector<8x8xf32>
    %63 = arith.subf %59, %62 : vector<8x8xf32>
    %64 = math.exp %63 : vector<8x8xf32>
    %cst_31 = arith.constant dense<0.000000e+00> : vector<8xf32>
    %65 = vector.multi_reduction <add>, %64, %cst_31 [1] : vector<8x8xf32> to vector<8xf32>
    %66 = vector.shape_cast %65 : vector<8xf32> to vector<8x1xf32>
    %67 = arith.truncf %64 : vector<8x8xf32> to vector<8x8xbf16>
    %cst_32 = arith.constant dense<0.000000e+00> : vector<8x8xf32>
    %68 = tpu.matmul %67, %58, %cst_32 {dimension_numbers = #tpu.dot_dimension_numbers<[1], [0], [0], [1], [0, 0, 1, 1], [], []>} : vector<8x8xbf16>, vector<8x8xbf16>, vector<8x8xf32> -> vector<8x8xf32>
    %69 = tpu.reciprocal %66 {approx = true} : vector<8x1xf32> -> vector<8x1xf32>
    %70 = vector.broadcast %69 : vector<8x1xf32> to vector<8x8xf32>
    %71 = arith.mulf %68, %70 : vector<8x8xf32>
    %c0_33 = arith.constant 0 : index
    %c16 = arith.constant 16 : index
    %72 = vector.load %arg12[%c0_33, %c16] : memref<16x32xf32, #tpu.memory_space<vmem>>, vector<8x8xf32>
    tpu.vector_store %arg12[%c0_33, %c16], %71 {strides = array<i32>} : memref<16x32xf32, #tpu.memory_space<vmem>>, vector<8x8xf32>,
    %73 = vector.extract_strided_slice %19 {offsets = [0, 24], sizes = [8, 8], strides = [1, 1]} : vector<16x32xbf16> to vector<8x8xbf16>
    %74 = vector.extract_strided_slice %20 {offsets = [0, 24], sizes = [8, 8], strides = [1, 1]} : vector<16x32xbf16> to vector<8x8xbf16>
    %75 = vector.extract_strided_slice %21 {offsets = [0, 24], sizes = [8, 8], strides = [1, 1]} : vector<16x32xbf16> to vector<8x8xbf16>
    "tpu.trace_start"() <{level = 10 : i32, message = "td,sd->ts"}> : () -> ()
    %cst_34 = arith.constant dense<0.000000e+00> : vector<8x8xf32>
    %76 = tpu.matmul %73, %74, %cst_34 {dimension_numbers = #tpu.dot_dimension_numbers<[1], [1], [0], [0], [0, 0, 1, 0], [], []>} : vector<8x8xbf16>, vector<8x8xbf16>, vector<8x8xf32> -> vector<8x8xf32>
    "tpu.trace_stop"() : () -> ()
    %cst_35 = arith.constant dense<0xFF800000> : vector<8xf32>
    %77 = vector.multi_reduction <maximumf>, %76, %cst_35 [1] : vector<8x8xf32> to vector<8xf32>
    %78 = vector.shape_cast %77 : vector<8xf32> to vector<8x1xf32>
    %79 = vector.broadcast %78 : vector<8x1xf32> to vector<8x8xf32>
    %80 = arith.subf %76, %79 : vector<8x8xf32>
    %81 = math.exp %80 : vector<8x8xf32>
    %cst_36 = arith.constant dense<0.000000e+00> : vector<8xf32>
    %82 = vector.multi_reduction <add>, %81, %cst_36 [1] : vector<8x8xf32> to vector<8xf32>
    %83 = vector.shape_cast %82 : vector<8xf32> to vector<8x1xf32>
    %84 = arith.truncf %81 : vector<8x8xf32> to vector<8x8xbf16>
    %cst_37 = arith.constant dense<0.000000e+00> : vector<8x8xf32>
    %85 = tpu.matmul %84, %75, %cst_37 {dimension_numbers = #tpu.dot_dimension_numbers<[1], [0], [0], [1], [0, 0, 1, 1], [], []>} : vector<8x8xbf16>, vector<8x8xbf16>, vector<8x8xf32> -> vector<8x8xf32>
    %86 = tpu.reciprocal %83 {approx = true} : vector<8x1xf32> -> vector<8x1xf32>
    %87 = vector.broadcast %86 : vector<8x1xf32> to vector<8x8xf32>
    %88 = arith.mulf %85, %87 : vector<8x8xf32>
    %c0_38 = arith.constant 0 : index
    %c24 = arith.constant 24 : index
    %89 = vector.load %arg12[%c0_38, %c24] : memref<16x32xf32, #tpu.memory_space<vmem>>, vector<8x8xf32>
    tpu.vector_store %arg12[%c0_38, %c24], %88 {strides = array<i32>} : memref<16x32xf32, #tpu.memory_space<vmem>>, vector<8x8xf32>,
    %90 = vector.extract_strided_slice %19 {offsets = [8, 0], sizes = [8, 8], strides = [1, 1]} : vector<16x32xbf16> to vector<8x8xbf16>
    %91 = vector.extract_strided_slice %20 {offsets = [8, 0], sizes = [8, 8], strides = [1, 1]} : vector<16x32xbf16> to vector<8x8xbf16>
    %92 = vector.extract_strided_slice %21 {offsets = [8, 0], sizes = [8, 8], strides = [1, 1]} : vector<16x32xbf16> to vector<8x8xbf16>
    "tpu.trace_start"() <{level = 10 : i32, message = "td,sd->ts"}> : () -> ()
    %cst_39 = arith.constant dense<0.000000e+00> : vector<8x8xf32>
    %93 = tpu.matmul %90, %91, %cst_39 {dimension_numbers = #tpu.dot_dimension_numbers<[1], [1], [0], [0], [0, 0, 1, 0], [], []>} : vector<8x8xbf16>, vector<8x8xbf16>, vector<8x8xf32> -> vector<8x8xf32>
    "tpu.trace_stop"() : () -> ()
    %cst_40 = arith.constant dense<0xFF800000> : vector<8xf32>
    %94 = vector.multi_reduction <maximumf>, %93, %cst_40 [1] : vector<8x8xf32> to vector<8xf32>
    %95 = vector.shape_cast %94 : vector<8xf32> to vector<8x1xf32>
    %96 = vector.broadcast %95 : vector<8x1xf32> to vector<8x8xf32>
    %97 = arith.subf %93, %96 : vector<8x8xf32>
    %98 = math.exp %97 : vector<8x8xf32>
    %cst_41 = arith.constant dense<0.000000e+00> : vector<8xf32>
    %99 = vector.multi_reduction <add>, %98, %cst_41 [1] : vector<8x8xf32> to vector<8xf32>
    %100 = vector.shape_cast %99 : vector<8xf32> to vector<8x1xf32>
    %101 = arith.truncf %98 : vector<8x8xf32> to vector<8x8xbf16>
    %cst_42 = arith.constant dense<0.000000e+00> : vector<8x8xf32>
    %102 = tpu.matmul %101, %92, %cst_42 {dimension_numbers = #tpu.dot_dimension_numbers<[1], [0], [0], [1], [0, 0, 1, 1], [], []>} : vector<8x8xbf16>, vector<8x8xbf16>, vector<8x8xf32> -> vector<8x8xf32>
    %103 = tpu.reciprocal %100 {approx = true} : vector<8x1xf32> -> vector<8x1xf32>
    %104 = vector.broadcast %103 : vector<8x1xf32> to vector<8x8xf32>
    %105 = arith.mulf %102, %104 : vector<8x8xf32>
    %c8_43 = arith.constant 8 : index
    %c0_44 = arith.constant 0 : index
    %106 = vector.load %arg12[%c8_43, %c0_44] : memref<16x32xf32, #tpu.memory_space<vmem>>, vector<8x8xf32>
    tpu.vector_store %arg12[%c8_43, %c0_44], %105 {strides = array<i32>} : memref<16x32xf32, #tpu.memory_space<vmem>>, vector<8x8xf32>,
    %107 = vector.extract_strided_slice %19 {offsets = [8, 8], sizes = [8, 8], strides = [1, 1]} : vector<16x32xbf16> to vector<8x8xbf16>
    %108 = vector.extract_strided_slice %20 {offsets = [8, 8], sizes = [8, 8], strides = [1, 1]} : vector<16x32xbf16> to vector<8x8xbf16>
    %109 = vector.extract_strided_slice %21 {offsets = [8, 8], sizes = [8, 8], strides = [1, 1]} : vector<16x32xbf16> to vector<8x8xbf16>
    "tpu.trace_start"() <{level = 10 : i32, message = "td,sd->ts"}> : () -> ()
    %cst_45 = arith.constant dense<0.000000e+00> : vector<8x8xf32>
    %110 = tpu.matmul %107, %108, %cst_45 {dimension_numbers = #tpu.dot_dimension_numbers<[1], [1], [0], [0], [0, 0, 1, 0], [], []>} : vector<8x8xbf16>, vector<8x8xbf16>, vector<8x8xf32> -> vector<8x8xf32>
    "tpu.trace_stop"() : () -> ()
    %cst_46 = arith.constant dense<0xFF800000> : vector<8xf32>
    %111 = vector.multi_reduction <maximumf>, %110, %cst_46 [1] : vector<8x8xf32> to vector<8xf32>
    %112 = vector.shape_cast %111 : vector<8xf32> to vector<8x1xf32>
    %113 = vector.broadcast %112 : vector<8x1xf32> to vector<8x8xf32>
    %114 = arith.subf %110, %113 : vector<8x8xf32>
    %115 = math.exp %114 : vector<8x8xf32>
    %cst_47 = arith.constant dense<0.000000e+00> : vector<8xf32>
    %116 = vector.multi_reduction <add>, %115, %cst_47 [1] : vector<8x8xf32> to vector<8xf32>
    %117 = vector.shape_cast %116 : vector<8xf32> to vector<8x1xf32>
    %118 = arith.truncf %115 : vector<8x8xf32> to vector<8x8xbf16>
    %cst_48 = arith.constant dense<0.000000e+00> : vector<8x8xf32>
    %119 = tpu.matmul %118, %109, %cst_48 {dimension_numbers = #tpu.dot_dimension_numbers<[1], [0], [0], [1], [0, 0, 1, 1], [], []>} : vector<8x8xbf16>, vector<8x8xbf16>, vector<8x8xf32> -> vector<8x8xf32>
    %120 = tpu.reciprocal %117 {approx = true} : vector<8x1xf32> -> vector<8x1xf32>
    %121 = vector.broadcast %120 : vector<8x1xf32> to vector<8x8xf32>
    %122 = arith.mulf %119, %121 : vector<8x8xf32>
    %c8_49 = arith.constant 8 : index
    %c8_50 = arith.constant 8 : index
    %123 = vector.load %arg12[%c8_49, %c8_50] : memref<16x32xf32, #tpu.memory_space<vmem>>, vector<8x8xf32>
    tpu.vector_store %arg12[%c8_49, %c8_50], %122 {strides = array<i32>} : memref<16x32xf32, #tpu.memory_space<vmem>>, vector<8x8xf32>,
    %124 = vector.extract_strided_slice %19 {offsets = [8, 16], sizes = [8, 8], strides = [1, 1]} : vector<16x32xbf16> to vector<8x8xbf16>
    %125 = vector.extract_strided_slice %20 {offsets = [8, 16], sizes = [8, 8], strides = [1, 1]} : vector<16x32xbf16> to vector<8x8xbf16>
    %126 = vector.extract_strided_slice %21 {offsets = [8, 16], sizes = [8, 8], strides = [1, 1]} : vector<16x32xbf16> to vector<8x8xbf16>
    "tpu.trace_start"() <{level = 10 : i32, message = "td,sd->ts"}> : () -> ()
    %cst_51 = arith.constant dense<0.000000e+00> : vector<8x8xf32>
    %127 = tpu.matmul %124, %125, %cst_51 {dimension_numbers = #tpu.dot_dimension_numbers<[1], [1], [0], [0], [0, 0, 1, 0], [], []>} : vector<8x8xbf16>, vector<8x8xbf16>, vector<8x8xf32> -> vector<8x8xf32>
    "tpu.trace_stop"() : () -> ()
    %cst_52 = arith.constant dense<0xFF800000> : vector<8xf32>
    %128 = vector.multi_reduction <maximumf>, %127, %cst_52 [1] : vector<8x8xf32> to vector<8xf32>
    %129 = vector.shape_cast %128 : vector<8xf32> to vector<8x1xf32>
    %130 = vector.broadcast %129 : vector<8x1xf32> to vector<8x8xf32>
    %131 = arith.subf %127, %130 : vector<8x8xf32>
    %132 = math.exp %131 : vector<8x8xf32>
    %cst_53 = arith.constant dense<0.000000e+00> : vector<8xf32>
    %133 = vector.multi_reduction <add>, %132, %cst_53 [1] : vector<8x8xf32> to vector<8xf32>
    %134 = vector.shape_cast %133 : vector<8xf32> to vector<8x1xf32>
    %135 = arith.truncf %132 : vector<8x8xf32> to vector<8x8xbf16>
    %cst_54 = arith.constant dense<0.000000e+00> : vector<8x8xf32>
    %136 = tpu.matmul %135, %126, %cst_54 {dimension_numbers = #tpu.dot_dimension_numbers<[1], [0], [0], [1], [0, 0, 1, 1], [], []>} : vector<8x8xbf16>, vector<8x8xbf16>, vector<8x8xf32> -> vector<8x8xf32>
    %137 = tpu.reciprocal %134 {approx = true} : vector<8x1xf32> -> vector<8x1xf32>
    %138 = vector.broadcast %137 : vector<8x1xf32> to vector<8x8xf32>
    %139 = arith.mulf %136, %138 : vector<8x8xf32>
    %c8_55 = arith.constant 8 : index
    %c16_56 = arith.constant 16 : index
    %140 = vector.load %arg12[%c8_55, %c16_56] : memref<16x32xf32, #tpu.memory_space<vmem>>, vector<8x8xf32>
    tpu.vector_store %arg12[%c8_55, %c16_56], %139 {strides = array<i32>} : memref<16x32xf32, #tpu.memory_space<vmem>>, vector<8x8xf32>,
    %141 = vector.extract_strided_slice %19 {offsets = [8, 24], sizes = [8, 8], strides = [1, 1]} : vector<16x32xbf16> to vector<8x8xbf16>
    %142 = vector.extract_strided_slice %20 {offsets = [8, 24], sizes = [8, 8], strides = [1, 1]} : vector<16x32xbf16> to vector<8x8xbf16>
    %143 = vector.extract_strided_slice %21 {offsets = [8, 24], sizes = [8, 8], strides = [1, 1]} : vector<16x32xbf16> to vector<8x8xbf16>
    "tpu.trace_start"() <{level = 10 : i32, message = "td,sd->ts"}> : () -> ()
    %cst_57 = arith.constant dense<0.000000e+00> : vector<8x8xf32>
    %144 = tpu.matmul %141, %142, %cst_57 {dimension_numbers = #tpu.dot_dimension_numbers<[1], [1], [0], [0], [0, 0, 1, 0], [], []>} : vector<8x8xbf16>, vector<8x8xbf16>, vector<8x8xf32> -> vector<8x8xf32>
    "tpu.trace_stop"() : () -> ()
    %cst_58 = arith.constant dense<0xFF800000> : vector<8xf32>
    %145 = vector.multi_reduction <maximumf>, %144, %cst_58 [1] : vector<8x8xf32> to vector<8xf32>
    %146 = vector.shape_cast %145 : vector<8xf32> to vector<8x1xf32>
    %147 = vector.broadcast %146 : vector<8x1xf32> to vector<8x8xf32>
    %148 = arith.subf %144, %147 : vector<8x8xf32>
    %149 = math.exp %148 : vector<8x8xf32>
    %cst_59 = arith.constant dense<0.000000e+00> : vector<8xf32>
    %150 = vector.multi_reduction <add>, %149, %cst_59 [1] : vector<8x8xf32> to vector<8xf32>
    %151 = vector.shape_cast %150 : vector<8xf32> to vector<8x1xf32>
    %152 = arith.truncf %149 : vector<8x8xf32> to vector<8x8xbf16>
    %cst_60 = arith.constant dense<0.000000e+00> : vector<8x8xf32>
    %153 = tpu.matmul %152, %143, %cst_60 {dimension_numbers = #tpu.dot_dimension_numbers<[1], [0], [0], [1], [0, 0, 1, 1], [], []>} : vector<8x8xbf16>, vector<8x8xbf16>, vector<8x8xf32> -> vector<8x8xf32>
    %154 = tpu.reciprocal %151 {approx = true} : vector<8x1xf32> -> vector<8x1xf32>
    %155 = vector.broadcast %154 : vector<8x1xf32> to vector<8x8xf32>
    %156 = arith.mulf %153, %155 : vector<8x8xf32>
    %c8_61 = arith.constant 8 : index
    %c24_62 = arith.constant 24 : index
    %157 = vector.load %arg12[%c8_61, %c24_62] : memref<16x32xf32, #tpu.memory_space<vmem>>, vector<8x8xf32>
    tpu.vector_store %arg12[%c8_61, %c24_62], %156 {strides = array<i32>} : memref<16x32xf32, #tpu.memory_space<vmem>>, vector<8x8xf32>,
    %c0_63 = arith.constant 0 : index
    %c0_64 = arith.constant 0 : index
    %158 = vector.load %arg12[%c0_63, %c0_64] : memref<16x32xf32, #tpu.memory_space<vmem>>, vector<16x32xf32>
    %159 = arith.truncf %158 : vector<16x32xf32> to vector<16x32xbf16>
    %c0_65 = arith.constant 0 : index
    %c0_66 = arith.constant 0 : index
    %160 = vector.load %arg9[%c0_65, %c0_66] : memref<32x32xbf16, #tpu.memory_space<vmem>>, vector<32x32xbf16>
    %cst_67 = arith.constant dense<0.000000e+00> : vector<16x32xf32>
    %161 = tpu.matmul %159, %160, %cst_67 {dimension_numbers = #tpu.dot_dimension_numbers<[1], [0], [0], [1], [0, 0, 1, 1], [], []>} : vector<16x32xbf16>, vector<32x32xbf16>, vector<16x32xf32> -> vector<16x32xf32>
    %c0_68 = arith.constant 0 : index
    %c0_69 = arith.constant 0 : index
    %162 = vector.load %arg10[%c0_68, %c0_69] : memref<1x32xf32, #tpu.memory_space<vmem>>, vector<1x32xf32>
    %163 = vector.broadcast %162 : vector<1x32xf32> to vector<16x32xf32>
    %164 = arith.addf %161, %163 : vector<16x32xf32>
    %c0_70 = arith.constant 0 : index
    %c0_71 = arith.constant 0 : index
    %165 = vector.load %arg11[%c0_70, %c0_71] : memref<16x32xf32, #tpu.memory_space<vmem>>, vector<16x32xf32>
    tpu.vector_store %arg11[%c0_70, %c0_71], %164 {strides = array<i32>} : memref<16x32xf32, #tpu.memory_space<vmem>>, vector<16x32xf32>,
    return
  }
  func.func @transform_0(%arg0: i32) -> (i32, i32) {
    %c0_i32 = arith.constant 0 : i32
    %c0_i32_0 = arith.constant 0 : i32
    return %arg0, %c0_i32 : i32, i32
  }
  func.func @transform_1(%arg0: i32) -> (i32, i32) {
    %c0_i32 = arith.constant 0 : i32
    %c0_i32_0 = arith.constant 0 : i32
    return %arg0, %c0_i32 : i32, i32
  }
  func.func @transform_2(%arg0: i32) -> (i32, i32) {
    %c0_i32 = arith.constant 0 : i32
    %c0_i32_0 = arith.constant 0 : i32
    %c0_i32_1 = arith.constant 0 : i32
    return %c0_i32, %c0_i32_0 : i32, i32
  }
  func.func @transform_3(%arg0: i32) -> (i32, i32) {
    %c0_i32 = arith.constant 0 : i32
    %c0_i32_0 = arith.constant 0 : i32
    %c0_i32_1 = arith.constant 0 : i32
    return %c0_i32, %c0_i32_0 : i32, i32
  }
  func.func @transform_4(%arg0: i32) -> (i32, i32) {
    %c0_i32 = arith.constant 0 : i32
    %c0_i32_0 = arith.constant 0 : i32
    %c0_i32_1 = arith.constant 0 : i32
    return %c0_i32, %c0_i32_0 : i32, i32
  }
  func.func @transform_5(%arg0: i32) -> (i32, i32) {
    %c0_i32 = arith.constant 0 : i32
    %c0_i32_0 = arith.constant 0 : i32
    %c0_i32_1 = arith.constant 0 : i32
    return %c0_i32, %c0_i32_0 : i32, i32
  }
  func.func @transform_6(%arg0: i32) -> (i32, i32) {
    %c0_i32 = arith.constant 0 : i32
    %c0_i32_0 = arith.constant 0 : i32
    %c0_i32_1 = arith.constant 0 : i32
    return %c0_i32, %c0_i32_0 : i32, i32
  }
  func.func @transform_7(%arg0: i32) -> (i32, i32) {
    %c0_i32 = arith.constant 0 : i32
    %c0_i32_0 = arith.constant 0 : i32
    %c0_i32_1 = arith.constant 0 : i32
    return %c0_i32, %c0_i32_0 : i32, i32
  }
  func.func @transform_8(%arg0: i32) -> (i32, i32) {
    %c0_i32 = arith.constant 0 : i32
    %c0_i32_0 = arith.constant 0 : i32
    %c0_i32_1 = arith.constant 0 : i32
    return %c0_i32, %c0_i32_0 : i32, i32
  }
  func.func @transform_9(%arg0: i32) -> (i32, i32) {
    %c0_i32 = arith.constant 0 : i32
    %c0_i32_0 = arith.constant 0 : i32
    %c0_i32_1 = arith.constant 0 : i32
    return %c0_i32, %c0_i32_0 : i32, i32
  }
  func.func @transform_10(%arg0: i32) -> (i32, i32) {
    %c0_i32 = arith.constant 0 : i32
    %c0_i32_0 = arith.constant 0 : i32
    return %arg0, %c0_i32 : i32, i32
  }
}

</mosaic_0001>

<llo_original>
// kernel: tpu_custom_call.1
$region0: #{tpu_custom_call.1}
  #allocation0 [shape = 'u32[]', space=smem, size = 0x4, offset = 0x4, fixed_abs, tag = 'smem constant byte address 0x4 - core index']
  #allocation1 [shape = 'u32[144,128]{1,0:T(1,128)}', space=vmem, size = 0x12000, scoped, tag = 'internal scratch']
  #allocation2 [shape = 'f32[16,32]{1,0:T(8,128)}', space=vmem, size = 0x2000, scoped, tag = 'scratch operand']
  %s0 = inlined_call_operand.hbm [shape: bf16[16,32], index: 0, kind: input, shape index: {}]
  %s1 = inlined_call_operand.hbm [shape: bf16[16,32], index: 1, kind: input, shape index: {}]
  %s2 = inlined_call_operand.hbm [shape: bf16[32,32], index: 2, kind: input, shape index: {}]
  %s3 = inlined_call_operand.vmem [shape: f32[1,32], index: 3, kind: input, shape index: {}]
  %s4 = inlined_call_operand.hbm [shape: bf16[32,32], index: 4, kind: input, shape index: {}]
  %s5 = inlined_call_operand.vmem [shape: f32[1,32], index: 5, kind: input, shape index: {}]
  %s6 = inlined_call_operand.hbm [shape: bf16[32,32], index: 6, kind: input, shape index: {}]
  %s7 = inlined_call_operand.vmem [shape: f32[1,32], index: 7, kind: input, shape index: {}]
  %s8 = inlined_call_operand.hbm [shape: bf16[32,32], index: 8, kind: input, shape index: {}]
  %s9 = inlined_call_operand.vmem [shape: f32[1,32], index: 9, kind: input, shape index: {}]
  %s10 = inlined_call_operand.hbm [shape: f32[16,32], index: 10, kind: output, shape index: {}]
  %s11 = sld [smem:[#allocation0]]
  $region74: #{tpu_custom_call.1} parent=0
    _
  %s13 = ssub.s32 1, %s11
  %s14 = scalar_select 0, %s13, %s11
  $region1: #{tpu_custom_call.1} parent=0
    #allocation3 [shape = 'u8[4096]{0}', space=vmem, size = 0x1000, scoped, tag = 'input window, operand 0, single buffered']
    #allocation4 [shape = 's32[1]{0}', space=sflag, size = 0x4, scoped, tag = 'scoped memory for tpu_custom_call.1']
    #allocation5 [shape = 's32[1]{0}', space=sflag, size = 0x4, scoped, tag = 'scoped memory for tpu_custom_call.1']
    #allocation6 [shape = 'u8[4096]{0}', space=vmem, size = 0x1000, scoped, tag = 'input window, operand 1, single buffered']
    #allocation7 [shape = 's32[1]{0}', space=sflag, size = 0x4, scoped, tag = 'scoped memory for tpu_custom_call.1']
    #allocation8 [shape = 'u8[8192]{0}', space=vmem, size = 0x2000, scoped, tag = 'input window, operand 2, single buffered']
    #allocation9 [shape = 'u8[8192]{0}', space=vmem, size = 0x2000, scoped, tag = 'input window, operand 4, single buffered']
    #allocation10 [shape = 's32[1]{0}', space=sflag, size = 0x4, scoped, tag = 'scoped memory for tpu_custom_call.1']
    #allocation11 [shape = 'u8[8192]{0}', space=vmem, size = 0x2000, scoped, tag = 'input window, operand 6, single buffered']
    #allocation12 [shape = 'u8[8192]{0}', space=vmem, size = 0x2000, scoped, tag = 'input window, operand 8, single buffered']
    #allocation13 [shape = 's32[1]{0}', space=sflag, size = 0x4, scoped, tag = 'scoped memory for tpu_custom_call.1']
    #allocation14 [shape = 'u8[8192]{0}', space=vmem, size = 0x2000, scoped, tag = 'output window, operand 0, single buffered']
    %15 = vsyncpa [#allocation4], 0
    %16 = vsyncpa [#allocation7], 0
    %17 = vsyncpa [#allocation10], 0
    %18 = vsyncpa [#allocation13], 0
    %19 = vsyncpa [#allocation5], 0
    // Predicated region
    $region2: #{tpu_custom_call.1} parent=1 // pred_check
      _
    $region3: #{tpu_custom_call.1} parent=1 // pred_check_branch
      %21 = sbr.rel (0) target = $region5
    $region4: #{tpu_custom_call.1} parent=1 // pred_region
      %s23 = ssub.s32 128, 128
      %24 = vsyncadd [#allocation4], %s23
      %s25 = sshll.u32 [#allocation3], 4
      %s26 = int_to_ptr.vmem [resolvable:$true] %s25
      %31 = dma.hbm_to_vmem [thread:$0]  %s0, 128, %s26, [#allocation4], 64, 64, 4
    $region5: #{tpu_custom_call.1} parent=1 // pred_fallthru
      _
    // Predicated region
    $region6: #{tpu_custom_call.1} parent=1 // pred_check
      _
    $region7: #{tpu_custom_call.1} parent=1 // pred_check_branch
      %33 = sbr.rel (0) target = $region9
    $region8: #{tpu_custom_call.1} parent=1 // pred_region
      %s35 = ssub.s32 128, 128
      %36 = vsyncadd [#allocation7], %s35
      %s37 = sshll.u32 [#allocation6], 4
      %s38 = int_to_ptr.vmem [resolvable:$true] %s37
      %43 = dma.hbm_to_vmem [thread:$0]  %s1, 128, %s38, [#allocation7], 64, 64, 4
    $region9: #{tpu_custom_call.1} parent=1 // pred_fallthru
      _
    // Predicated region
    $region10: #{tpu_custom_call.1} parent=1 // pred_check
      _
    $region11: #{tpu_custom_call.1} parent=1 // pred_check_branch
      %45 = sbr.rel (0) target = $region13
    $region12: #{tpu_custom_call.1} parent=1 // pred_region
      %s47 = ssub.s32 256, 256
      %48 = vsyncadd [#allocation7], %s47
      %s49 = sshll.u32 [#allocation8], 4
      %s50 = int_to_ptr.vmem [resolvable:$true] %s49
      %55 = dma.hbm_to_vmem [thread:$0]  %s2, 256, %s50, [#allocation7], 64, 64, 4
    $region13: #{tpu_custom_call.1} parent=1 // pred_fallthru
      _
    // Predicated region
    $region14: #{tpu_custom_call.1} parent=1 // pred_check
      _
    $region15: #{tpu_custom_call.1} parent=1 // pred_check_branch
      %57 = sbr.rel (0) target = $region17
    $region16: #{tpu_custom_call.1} parent=1 // pred_region
      _
    $region17: #{tpu_custom_call.1} parent=1 // pred_fallthru
      _
    // Predicated region
    $region18: #{tpu_custom_call.1} parent=1 // pred_check
      _
    $region19: #{tpu_custom_call.1} parent=1 // pred_check_branch
      %59 = sbr.rel (0) target = $region21
    $region20: #{tpu_custom_call.1} parent=1 // pred_region
      %s61 = ssub.s32 256, 256
      %62 = vsyncadd [#allocation10], %s61
      %s63 = sshll.u32 [#allocation9], 4
      %s64 = int_to_ptr.vmem [resolvable:$true] %s63
      %69 = dma.hbm_to_vmem [thread:$0]  %s4, 256, %s64, [#allocation10], 64, 64, 4
    $region21: #{tpu_custom_call.1} parent=1 // pred_fallthru
      _
    // Predicated region
    $region22: #{tpu_custom_call.1} parent=1 // pred_check
      _
    $region23: #{tpu_custom_call.1} parent=1 // pred_check_branch
      %71 = sbr.rel (0) target = $region25
    $region24: #{tpu_custom_call.1} parent=1 // pred_region
      _
    $region25: #{tpu_custom_call.1} parent=1 // pred_fallthru
      _
    // Predicated region
    $region26: #{tpu_custom_call.1} parent=1 // pred_check
      _
    $region27: #{tpu_custom_call.1} parent=1 // pred_check_branch
      %73 = sbr.rel (0) target = $region29
    $region28: #{tpu_custom_call.1} parent=1 // pred_region
      %s75 = ssub.s32 256, 256
      %76 = vsyncadd [#allocation10], %s75
      %s77 = sshll.u32 [#allocation11], 4
      %s78 = int_to_ptr.vmem [resolvable:$true] %s77
      %83 = dma.hbm_to_vmem [thread:$0]  %s6, 256, %s78, [#allocation10], 64, 64, 4
    $region29: #{tpu_custom_call.1} parent=1 // pred_fallthru
      _
    // Predicated region
    $region30: #{tpu_custom_call.1} parent=1 // pred_check
      _
    $region31: #{tpu_custom_call.1} parent=1 // pred_check_branch
      %85 = sbr.rel (0) target = $region33
    $region32: #{tpu_custom_call.1} parent=1 // pred_region
      _
    $region33: #{tpu_custom_call.1} parent=1 // pred_fallthru
      _
    // Predicated region
    $region34: #{tpu_custom_call.1} parent=1 // pred_check
      _
    $region35: #{tpu_custom_call.1} parent=1 // pred_check_branch
      %87 = sbr.rel (0) target = $region37
    $region36: #{tpu_custom_call.1} parent=1 // pred_region
      %s89 = ssub.s32 256, 256
      %90 = vsyncadd [#allocation13], %s89
      %s91 = sshll.u32 [#allocation12], 4
      %s92 = int_to_ptr.vmem [resolvable:$true] %s91
      %97 = dma.hbm_to_vmem [thread:$0]  %s8, 256, %s92, [#allocation13], 64, 64, 4
    $region37: #{tpu_custom_call.1} parent=1 // pred_fallthru
      _
    // Predicated region
    $region38: #{tpu_custom_call.1} parent=1 // pred_check
      _
    $region39: #{tpu_custom_call.1} parent=1 // pred_check_branch
      %99 = sbr.rel (0) target = $region41
    $region40: #{tpu_custom_call.1} parent=1 // pred_region
      _
    $region41: #{tpu_custom_call.1} parent=1 // pred_fallthru
      _
    // Predicated region
    $region42: #{tpu_custom_call.1} parent=1 // pred_check
      _
    $region43: #{tpu_custom_call.1} parent=1 // pred_check_branch
      %101 = sbr.rel (0) target = $region45
    $region44: #{tpu_custom_call.1} parent=1 // pred_region
      %102 = dma.done [#allocation4], 128
    $region45: #{tpu_custom_call.1} parent=1 // pred_fallthru
      _
    // Predicated region
    $region46: #{tpu_custom_call.1} parent=1 // pred_check
      _
    $region47: #{tpu_custom_call.1} parent=1 // pred_check_branch
      %104 = sbr.rel (0) target = $region49
    $region48: #{tpu_custom_call.1} parent=1 // pred_region
      %105 = dma.done [#allocation7], 128
    $region49: #{tpu_custom_call.1} parent=1 // pred_fallthru
      _
    // Predicated region
    $region50: #{tpu_custom_call.1} parent=1 // pred_check
      _
    $region51: #{tpu_custom_call.1} parent=1 // pred_check_branch
      %107 = sbr.rel (0) target = $region53
    $region52: #{tpu_custom_call.1} parent=1 // pred_region
      %108 = dma.done [#allocation7], 256
    $region53: #{tpu_custom_call.1} parent=1 // pred_fallthru
      _
    // Predicated region
    $region54: #{tpu_custom_call.1} parent=1 // pred_check
      _
    $region55: #{tpu_custom_call.1} parent=1 // pred_check_branch
      %110 = sbr.rel (0) target = $region57
    $region56: #{tpu_custom_call.1} parent=1 // pred_region
      %111 = dma.done [#allocation10], 256
    $region57: #{tpu_custom_call.1} parent=1 // pred_fallthru
      _
    // Predicated region
    $region58: #{tpu_custom_call.1} parent=1 // pred_check
      _
    $region59: #{tpu_custom_call.1} parent=1 // pred_check_branch
      %113 = sbr.rel (0) target = $region61
    $region60: #{tpu_custom_call.1} parent=1 // pred_region
      %114 = dma.done [#allocation10], 256
    $region61: #{tpu_custom_call.1} parent=1 // pred_fallthru
      _
    // Predicated region
    $region62: #{tpu_custom_call.1} parent=1 // pred_check
      _
    $region63: #{tpu_custom_call.1} parent=1 // pred_check_branch
      %116 = sbr.rel (0) target = $region65
    $region64: #{tpu_custom_call.1} parent=1 // pred_region
      %117 = dma.done [#allocation13], 256
    $region65: #{tpu_custom_call.1} parent=1 // pred_fallthru
      _
    %v119 = vld [vmem:[#allocation3] sm:$0xf]
    %v120 = vld [vmem:[#allocation3 + $0x4] sm:$0xf]
    %v121 = vld [vmem:[#allocation6] sm:$0xf]
    %v122 = vld [vmem:[#allocation6 + $0x4] sm:$0xf]
    %v123 = vld [vmem:[#allocation8] sm:$0xf]
    %v124 = vld [vmem:[#allocation8 + $0x4] sm:$0xf]
    %v125 = vld [vmem:[#allocation8 + $0x8] sm:$0xf]
    %v126 = vld [vmem:[#allocation8 + $0xc] sm:$0xf]
    %v127 = vld [vmem:[%s3] sm:$0x1]
    %v129 = vlaneseq
    %v130 = vshrl.u32 %v129, 7
    %v131 = vsub.s32 0, %v130
    %v132 = vrot.slane %v127, %v131
    %v136 = vunpack.c.l.b16 %v119
    %v137 = vunpack.c.l.b16 %v120
    %v138 = vpack.c.b16 %v137, %v136
    %v143 = vunpack.c.l.b16 %v123
    %v144 = vunpack.c.l.b16 %v124
    %v145 = vunpack.c.l.b16 %v125
    %v146 = vunpack.c.l.b16 %v126
    %v147 = vpack.c.b16 %v144, %v143
    %v148 = vpack.c.b16 %v146, %v145
    %vm151 = vcmask 261120
    %v153 = vsel %vm151, %v138, 0
    %155 = vmatprep.subr.bf16.mxu0 0
    %156 = vmatpush1.bf16.msra.mxu0 0
    %157 = vmatprep.subr.bf16.mxu0 0
    %158 = vmatpush1.bf16.msra.mxu0 0
    %159 = vmatprep.subr.bf16.mxu0 0
    %160 = vmatpush1.bf16.msra.mxu0 0
    %161 = vmatprep.subr.bf16.mxu0 0
    %162 = vmatpush1.bf16.msra.mxu0 0
    %163 = vmatprep.subr.bf16.mxu0 0
    %164 = vmatpush1.bf16.msra.mxu0 0
    %165 = vmatprep.subr.bf16.mxu0 0
    %166 = vmatpush1.bf16.msra.mxu0 0
    %167 = vmatprep.subr.bf16.mxu0 0
    %168 = vmatpush1.bf16.msra.mxu0 %v148
    %169 = vmatprep.subr.bf16.mxu0 0
    %170 = vmatpush1.bf16.msra.mxu0 %v147
    %171 = vmatprep.subr.bf16.mxu0 0
    %172 = vmatpush2.bf16.msra.mxu0 0
    %173 = vmatprep.subr.bf16.mxu0 0
    %174 = vmatpush2.bf16.msra.mxu0 0
    %175 = vmatprep.subr.bf16.mxu0 0
    %176 = vmatpush2.bf16.msra.mxu0 0
    %177 = vmatprep.subr.bf16.mxu0 0
    %178 = vmatpush2.bf16.msra.mxu0 0
    %179 = vmatprep.subr.bf16.mxu0 0
    %180 = vmatpush2.bf16.msra.mxu0 0
    %181 = vmatprep.subr.bf16.mxu0 0
    %182 = vmatpush2.bf16.msra.mxu0 0
    %183 = vmatprep.subr.bf16.mxu0 0
    %184 = vmatpush2.bf16.msra.mxu0 0
    %185 = vmatprep.subr.bf16.mxu0 0
    %186 = vmatpush2.bf16.msra.mxu0 0
    %187 = vmatprep.mubr.bf16.mxu0 0
    %188 = vmatmul.mubr.bf16.gmra.mxu0 %v153
    %v189 = vpop.f32.mrf.mxu0
    %v190 = vadd.f32 %v132, %v189
    %v191 = vpop.f32.mrf.mxu0
    %v192 = vpop.f32.mrf.mxu0
    %v193 = vadd.f32 %v132, %v192
    %v194 = vpop.f32.mrf.mxu0
    %195 = vdwg.mxu0
    %v196 = vmul.f32 %v190, 0.35355338
    %v197 = vmul.f32 %v193, 0.35355338
    %v198 = vld [vmem:[#allocation9] sm:$0xf]
    %v199 = vld [vmem:[#allocation9 + $0x4] sm:$0xf]
    %v200 = vld [vmem:[#allocation9 + $0x8] sm:$0xf]
    %v201 = vld [vmem:[#allocation9 + $0xc] sm:$0xf]
    %v202 = vld [vmem:[%s5] sm:$0x1]
    %v204 = vlaneseq
    %v205 = vshrl.u32 %v204, 7
    %v206 = vsub.s32 0, %v205
    %v207 = vrot.slane %v202, %v206
    %v211 = vunpack.c.l.b16 %v121
    %v212 = vunpack.c.l.b16 %v122
    %v213 = vpack.c.b16 %v212, %v211
    %v218 = vunpack.c.l.b16 %v198
    %v219 = vunpack.c.l.b16 %v199
    %v220 = vunpack.c.l.b16 %v200
    %v221 = vunpack.c.l.b16 %v201
    %v222 = vpack.c.b16 %v219, %v218
    %v223 = vpack.c.b16 %v221, %v220
    %v227 = vsel %vm151, %v213, 0
    %229 = vmatprep.subr.bf16.mxu0 0
    %230 = vmatpush1.bf16.msra.mxu0 0
    %231 = vmatprep.subr.bf16.mxu0 0
    %232 = vmatpush1.bf16.msra.mxu0 0
    %233 = vmatprep.subr.bf16.mxu0 0
    %234 = vmatpush1.bf16.msra.mxu0 0
    %235 = vmatprep.subr.bf16.mxu0 0
    %236 = vmatpush1.bf16.msra.mxu0 0
    %237 = vmatprep.subr.bf16.mxu0 0
    %238 = vmatpush1.bf16.msra.mxu0 0
    %239 = vmatprep.subr.bf16.mxu0 0
    %240 = vmatpush1.bf16.msra.mxu0 0
    %241 = vmatprep.subr.bf16.mxu0 0
    %242 = vmatpush1.bf16.msra.mxu0 %v223
    %243 = vmatprep.subr.bf16.mxu0 0
    %244 = vmatpush1.bf16.msra.mxu0 %v222
    %245 = vmatprep.subr.bf16.mxu0 0
    %246 = vmatpush2.bf16.msra.mxu0 0
    %247 = vmatprep.subr.bf16.mxu0 0
    %248 = vmatpush2.bf16.msra.mxu0 0
    %249 = vmatprep.subr.bf16.mxu0 0
    %250 = vmatpush2.bf16.msra.mxu0 0
    %251 = vmatprep.subr.bf16.mxu0 0
    %252 = vmatpush2.bf16.msra.mxu0 0
    %253 = vmatprep.subr.bf16.mxu0 0
    %254 = vmatpush2.bf16.msra.mxu0 0
    %255 = vmatprep.subr.bf16.mxu0 0
    %256 = vmatpush2.bf16.msra.mxu0 0
    %257 = vmatprep.subr.bf16.mxu0 0
    %258 = vmatpush2.bf16.msra.mxu0 0
    %259 = vmatprep.subr.bf16.mxu0 0
    %260 = vmatpush2.bf16.msra.mxu0 0
    %261 = vmatprep.mubr.bf16.mxu0 0
    %262 = vmatmul.mubr.bf16.gmra.mxu0 %v227
    %v263 = vpop.f32.mrf.mxu0
    %v264 = vadd.f32 %v207, %v263
    %v265 = vpop.f32.mrf.mxu0
    %v266 = vpop.f32.mrf.mxu0
    %v267 = vadd.f32 %v207, %v266
    %v268 = vpop.f32.mrf.mxu0
    %269 = vdwg.mxu0
    %v270 = vld [vmem:[#allocation11] sm:$0xf]
    %v271 = vld [vmem:[#allocation11 + $0x4] sm:$0xf]
    %v272 = vld [vmem:[#allocation11 + $0x8] sm:$0xf]
    %v273 = vld [vmem:[#allocation11 + $0xc] sm:$0xf]
    %v274 = vld [vmem:[%s7] sm:$0x1]
    %v276 = vlaneseq
    %v277 = vshrl.u32 %v276, 7
    %v278 = vsub.s32 0, %v277
    %v279 = vrot.slane %v274, %v278
    %v285 = vunpack.c.l.b16 %v270
    %v286 = vunpack.c.l.b16 %v271
    %v287 = vunpack.c.l.b16 %v272
    %v288 = vunpack.c.l.b16 %v273
    %v289 = vpack.c.b16 %v286, %v285
    %v290 = vpack.c.b16 %v288, %v287
    %293 = vmatprep.subr.bf16.mxu0 0
    %294 = vmatpush1.bf16.msra.mxu0 0
    %295 = vmatprep.subr.bf16.mxu0 0
    %296 = vmatpush1.bf16.msra.mxu0 0
    %297 = vmatprep.subr.bf16.mxu0 0
    %298 = vmatpush1.bf16.msra.mxu0 0
    %299 = vmatprep.subr.bf16.mxu0 0
    %300 = vmatpush1.bf16.msra.mxu0 0
    %301 = vmatprep.subr.bf16.mxu0 0
    %302 = vmatpush1.bf16.msra.mxu0 0
    %303 = vmatprep.subr.bf16.mxu0 0
    %304 = vmatpush1.bf16.msra.mxu0 0
    %305 = vmatprep.subr.bf16.mxu0 0
    %306 = vmatpush1.bf16.msra.mxu0 %v290
    %307 = vmatprep.subr.bf16.mxu0 0
    %308 = vmatpush1.bf16.msra.mxu0 %v289
    %309 = vmatprep.subr.bf16.mxu0 0
    %310 = vmatpush2.bf16.msra.mxu0 0
    %311 = vmatprep.subr.bf16.mxu0 0
    %312 = vmatpush2.bf16.msra.mxu0 0
    %313 = vmatprep.subr.bf16.mxu0 0
    %314 = vmatpush2.bf16.msra.mxu0 0
    %315 = vmatprep.subr.bf16.mxu0 0
    %316 = vmatpush2.bf16.msra.mxu0 0
    %317 = vmatprep.subr.bf16.mxu0 0
    %318 = vmatpush2.bf16.msra.mxu0 0
    %319 = vmatprep.subr.bf16.mxu0 0
    %320 = vmatpush2.bf16.msra.mxu0 0
    %321 = vmatprep.subr.bf16.mxu0 0
    %322 = vmatpush2.bf16.msra.mxu0 0
    %323 = vmatprep.subr.bf16.mxu0 0
    %324 = vmatpush2.bf16.msra.mxu0 0
    %325 = vmatprep.mubr.bf16.mxu0 0
    %326 = vmatmul.mubr.bf16.gmra.mxu0 %v227
    %v327 = vpop.f32.mrf.mxu0
    %v328 = vadd.f32 %v279, %v327
    %v329 = vpop.f32.mrf.mxu0
    %v330 = vpop.f32.mrf.mxu0
    %v331 = vadd.f32 %v279, %v330
    %v332 = vpop.f32.mrf.mxu0
    %333 = vdwg.mxu0
    %v334 = vpack.c.bf16 %v197, %v196
    %v335 = vpack.c.bf16 %v267, %v264
    %v336 = vpack.c.bf16 %v331, %v328
    %vm337 = vcmask 64512
    %v339 = vsel %vm337, %v334, 0
    %v342 = vsel %vm337, %v335, 0
    %344 = vmatprep.subr.bf16.mxu0 0
    %345 = vmatpush1.bf16.xpose.msra.mxu0 0
    %346 = vmatprep.subr.bf16.mxu0 0
    %347 = vmatpush1.bf16.xpose.msra.mxu0 0
    %348 = vmatprep.subr.bf16.mxu0 0
    %349 = vmatpush1.bf16.xpose.msra.mxu0 0
    %350 = vmatprep.subr.bf16.mxu0 0
    %351 = vmatpush1.bf16.xpose.msra.mxu0 0
    %352 = vmatprep.subr.bf16.mxu0 0
    %353 = vmatpush1.bf16.xpose.msra.mxu0 0
    %354 = vmatprep.subr.bf16.mxu0 0
    %355 = vmatpush1.bf16.xpose.msra.mxu0 0
    %356 = vmatprep.subr.bf16.mxu0 0
    %357 = vmatpush1.bf16.xpose.msra.mxu0 0
    %358 = vmatprep.subr.bf16.mxu0 0
    %359 = vmatpush1.bf16.xpose.msra.mxu0 %v342
    %360 = vmatprep.subr.bf16.mxu0 0
    %361 = vmatpush2.bf16.xpose.msra.mxu0 0
    %362 = vmatprep.subr.bf16.mxu0 0
    %363 = vmatpush2.bf16.xpose.msra.mxu0 0
    %364 = vmatprep.subr.bf16.mxu0 0
    %365 = vmatpush2.bf16.xpose.msra.mxu0 0
    %366 = vmatprep.subr.bf16.mxu0 0
    %367 = vmatpush2.bf16.xpose.msra.mxu0 0
    %368 = vmatprep.subr.bf16.mxu0 0
    %369 = vmatpush2.bf16.xpose.msra.mxu0 0
    %370 = vmatprep.subr.bf16.mxu0 0
    %371 = vmatpush2.bf16.xpose.msra.mxu0 0
    %372 = vmatprep.subr.bf16.mxu0 0
    %373 = vmatpush2.bf16.xpose.msra.mxu0 0
    %374 = vmatprep.subr.bf16.mxu0 0
    %375 = vmatpush2.bf16.xpose.msra.mxu0 0
    %376 = vmatprep.mubr.bf16.mxu0 0
    %377 = vmatmul.mubr.bf16.gmra.mxu0 %v339
    %v378 = vpop.f32.mrf.mxu0
    %v379 = vadd.f32 0.0, %v378
    %v380 = vpop.f32.mrf.mxu0
    %v381 = vpop.f32.mrf.mxu0
    %v382 = vpop.f32.mrf.mxu0
    %383 = vdwg.mxu0
    %v384 = vsel %vm337, %v379, -inf
    %385 = vmax.xlane.f32.xlu0 %v384
    %v386 = vpop.xlane.xlu0 %385
    %v387 = vsub.f32 %v379, %v386
    %v388 = vmul.f32 %v387, 1.442695
    %v389 = vpow.pop %v388
    %v390 = vsel %vm337, %v389, 0.0
    %391 = vadd.xlane.f32.xlu0 %v390
    %v392 = vpop.xlane.xlu0 %391
    %v393 = vpack.c.bf16 %v389, %v389
    %v395 = vsel %vm337, %v393, 0
    %vm397 = vcmask 1043456
    %v399 = vsel %vm397, %v336, 0
    %401 = vmatprep.subr.bf16.mxu0 0
    %402 = vmatpush1.bf16.msra.mxu0 0
    %403 = vmatprep.subr.bf16.mxu0 0
    %404 = vmatpush1.bf16.msra.mxu0 0
    %405 = vmatprep.subr.bf16.mxu0 0
    %406 = vmatpush1.bf16.msra.mxu0 0
    %407 = vmatprep.subr.bf16.mxu0 0
    %408 = vmatpush1.bf16.msra.mxu0 0
    %409 = vmatprep.subr.bf16.mxu0 0
    %410 = vmatpush1.bf16.msra.mxu0 0
    %411 = vmatprep.subr.bf16.mxu0 0
    %412 = vmatpush1.bf16.msra.mxu0 0
    %413 = vmatprep.subr.bf16.mxu0 0
    %414 = vmatpush1.bf16.msra.mxu0 0
    %415 = vmatprep.subr.bf16.mxu0 0
    %416 = vmatpush1.bf16.msra.mxu0 %v399
    %417 = vmatprep.subr.bf16.mxu0 0
    %418 = vmatpush2.bf16.msra.mxu0 0
    %419 = vmatprep.subr.bf16.mxu0 0
    %420 = vmatpush2.bf16.msra.mxu0 0
    %421 = vmatprep.subr.bf16.mxu0 0
    %422 = vmatpush2.bf16.msra.mxu0 0
    %423 = vmatprep.subr.bf16.mxu0 0
    %424 = vmatpush2.bf16.msra.mxu0 0
    %425 = vmatprep.subr.bf16.mxu0 0
    %426 = vmatpush2.bf16.msra.mxu0 0
    %427 = vmatprep.subr.bf16.mxu0 0
    %428 = vmatpush2.bf16.msra.mxu0 0
    %429 = vmatprep.subr.bf16.mxu0 0
    %430 = vmatpush2.bf16.msra.mxu0 0
    %431 = vmatprep.subr.bf16.mxu0 0
    %432 = vmatpush2.bf16.msra.mxu0 0
    %433 = vmatprep.mubr.bf16.mxu0 0
    %434 = vmatmul.mubr.bf16.gmra.mxu0 %v395
    %v435 = vpop.f32.mrf.mxu0
    %v436 = vadd.f32 0.0, %v435
    %v437 = vpop.f32.mrf.mxu0
    %v438 = vpop.f32.mrf.mxu0
    %v439 = vpop.f32.mrf.mxu0
    %440 = vdwg.mxu0
    %v441 = vrcp.pop %v392
    %v442 = vmul.f32 %v436, %v441
    %443 = vst.msk [vmem:[#allocation2] sm:$0xff] %vm337, %v442
    %445 = vrot.lane.b32.xlu0 %v334, 120
    %v446 = vpop.permute.xlu0 %445
    %448 = vrot.lane.b32.xlu0 %v335, 120
    %v449 = vpop.permute.xlu0 %448
    %v451 = vsel %vm337, %v446, 0
    %v454 = vsel %vm337, %v449, 0
    %456 = vmatprep.subr.bf16.mxu0 0
    %457 = vmatpush1.bf16.xpose.msra.mxu0 0
    %458 = vmatprep.subr.bf16.mxu0 0
    %459 = vmatpush1.bf16.xpose.msra.mxu0 0
    %460 = vmatprep.subr.bf16.mxu0 0
    %461 = vmatpush1.bf16.xpose.msra.mxu0 0
    %462 = vmatprep.subr.bf16.mxu0 0
    %463 = vmatpush1.bf16.xpose.msra.mxu0 0
    %464 = vmatprep.subr.bf16.mxu0 0
    %465 = vmatpush1.bf16.xpose.msra.mxu0 0
    %466 = vmatprep.subr.bf16.mxu0 0
    %467 = vmatpush1.bf16.xpose.msra.mxu0 0
    %468 = vmatprep.subr.bf16.mxu0 0
    %469 = vmatpush1.bf16.xpose.msra.mxu0 0
    %470 = vmatprep.subr.bf16.mxu0 0
    %471 = vmatpush1.bf16.xpose.msra.mxu0 %v454
    %472 = vmatprep.subr.bf16.mxu0 0
    %473 = vmatpush2.bf16.xpose.msra.mxu0 0
    %474 = vmatprep.subr.bf16.mxu0 0
    %475 = vmatpush2.bf16.xpose.msra.mxu0 0
    %476 = vmatprep.subr.bf16.mxu0 0
    %477 = vmatpush2.bf16.xpose.msra.mxu0 0
    %478 = vmatprep.subr.bf16.mxu0 0
    %479 = vmatpush2.bf16.xpose.msra.mxu0 0
    %480 = vmatprep.subr.bf16.mxu0 0
    %481 = vmatpush2.bf16.xpose.msra.mxu0 0
    %482 = vmatprep.subr.bf16.mxu0 0
    %483 = vmatpush2.bf16.xpose.msra.mxu0 0
    %484 = vmatprep.subr.bf16.mxu0 0
    %485 = vmatpush2.bf16.xpose.msra.mxu0 0
    %486 = vmatprep.subr.bf16.mxu0 0
    %487 = vmatpush2.bf16.xpose.msra.mxu0 0
    %488 = vmatprep.mubr.bf16.mxu0 0
    %489 = vmatmul.mubr.bf16.gmra.mxu0 %v451
    %v490 = vpop.f32.mrf.mxu0
    %v491 = vadd.f32 0.0, %v490
    %v492 = vpop.f32.mrf.mxu0
    %v493 = vpop.f32.mrf.mxu0
    %v494 = vpop.f32.mrf.mxu0
    %495 = vdwg.mxu0
    %v496 = vsel %vm337, %v491, -inf
    %497 = vmax.xlane.f32.xlu0 %v496
    %v498 = vpop.xlane.xlu0 %497
    %v499 = vsub.f32 %v491, %v498
    %v500 = vmul.f32 %v499, 1.442695
    %v501 = vpow.pop %v500
    %v502 = vsel %vm337, %v501, 0.0
    %503 = vadd.xlane.f32.xlu0 %v502
    %v504 = vpop.xlane.xlu0 %503
    %v505 = vpack.c.bf16 %v501, %v501
    %507 = vrot.lane.b32.xlu0 %v336, 120
    %v508 = vpop.permute.xlu0 %507
    %v510 = vsel %vm337, %v505, 0
    %v513 = vsel %vm397, %v508, 0
    %515 = vmatprep.subr.bf16.mxu0 0
    %516 = vmatpush1.bf16.msra.mxu0 0
    %517 = vmatprep.subr.bf16.mxu0 0
    %518 = vmatpush1.bf16.msra.mxu0 0
    %519 = vmatprep.subr.bf16.mxu0 0
    %520 = vmatpush1.bf16.msra.mxu0 0
    %521 = vmatprep.subr.bf16.mxu0 0
    %522 = vmatpush1.bf16.msra.mxu0 0
    %523 = vmatprep.subr.bf16.mxu0 0
    %524 = vmatpush1.bf16.msra.mxu0 0
    %525 = vmatprep.subr.bf16.mxu0 0
    %526 = vmatpush1.bf16.msra.mxu0 0
    %527 = vmatprep.subr.bf16.mxu0 0
    %528 = vmatpush1.bf16.msra.mxu0 0
    %529 = vmatprep.subr.bf16.mxu0 0
    %530 = vmatpush1.bf16.msra.mxu0 %v513
    %531 = vmatprep.subr.bf16.mxu0 0
    %532 = vmatpush2.bf16.msra.mxu0 0
    %533 = vmatprep.subr.bf16.mxu0 0
    %534 = vmatpush2.bf16.msra.mxu0 0
    %535 = vmatprep.subr.bf16.mxu0 0
    %536 = vmatpush2.bf16.msra.mxu0 0
    %537 = vmatprep.subr.bf16.mxu0 0
    %538 = vmatpush2.bf16.msra.mxu0 0
    %539 = vmatprep.subr.bf16.mxu0 0
    %540 = vmatpush2.bf16.msra.mxu0 0
    %541 = vmatprep.subr.bf16.mxu0 0
    %542 = vmatpush2.bf16.msra.mxu0 0
    %543 = vmatprep.subr.bf16.mxu0 0
    %544 = vmatpush2.bf16.msra.mxu0 0
    %545 = vmatprep.subr.bf16.mxu0 0
    %546 = vmatpush2.bf16.msra.mxu0 0
    %547 = vmatprep.mubr.bf16.mxu0 0
    %548 = vmatmul.mubr.bf16.gmra.mxu0 %v510
    %v549 = vpop.f32.mrf.mxu0
    %v550 = vadd.f32 0.0, %v549
    %v551 = vpop.f32.mrf.mxu0
    %v552 = vpop.f32.mrf.mxu0
    %v553 = vpop.f32.mrf.mxu0
    %554 = vdwg.mxu0
    %v555 = vrcp.pop %v504
    %v556 = vmul.f32 %v550, %v555
    %558 = vrot.lane.b32.xlu0 %v556, 8
    %v559 = vpop.permute.xlu0 %558
    %vm561 = vcmask 130112
    %562 = vst.msk [vmem:[#allocation2] sm:$0xff] %vm561, %v559
    %563 = vrot.lane.b32.xlu0 %v334, 112
    %v564 = vpop.permute.xlu0 %563
    %565 = vrot.lane.b32.xlu0 %v335, 112
    %v566 = vpop.permute.xlu0 %565
    %v568 = vsel %vm337, %v564, 0
    %v571 = vsel %vm337, %v566, 0
    %573 = vmatprep.subr.bf16.mxu0 0
    %574 = vmatpush1.bf16.xpose.msra.mxu0 0
    %575 = vmatprep.subr.bf16.mxu0 0
    %576 = vmatpush1.bf16.xpose.msra.mxu0 0
    %577 = vmatprep.subr.bf16.mxu0 0
    %578 = vmatpush1.bf16.xpose.msra.mxu0 0
    %579 = vmatprep.subr.bf16.mxu0 0
    %580 = vmatpush1.bf16.xpose.msra.mxu0 0
    %581 = vmatprep.subr.bf16.mxu0 0
    %582 = vmatpush1.bf16.xpose.msra.mxu0 0
    %583 = vmatprep.subr.bf16.mxu0 0
    %584 = vmatpush1.bf16.xpose.msra.mxu0 0
    %585 = vmatprep.subr.bf16.mxu0 0
    %586 = vmatpush1.bf16.xpose.msra.mxu0 0
    %587 = vmatprep.subr.bf16.mxu0 0
    %588 = vmatpush1.bf16.xpose.msra.mxu0 %v571
    %589 = vmatprep.subr.bf16.mxu0 0
    %590 = vmatpush2.bf16.xpose.msra.mxu0 0
    %591 = vmatprep.subr.bf16.mxu0 0
    %592 = vmatpush2.bf16.xpose.msra.mxu0 0
    %593 = vmatprep.subr.bf16.mxu0 0
    %594 = vmatpush2.bf16.xpose.msra.mxu0 0
    %595 = vmatprep.subr.bf16.mxu0 0
    %596 = vmatpush2.bf16.xpose.msra.mxu0 0
    %597 = vmatprep.subr.bf16.mxu0 0
    %598 = vmatpush2.bf16.xpose.msra.mxu0 0
    %599 = vmatprep.subr.bf16.mxu0 0
    %600 = vmatpush2.bf16.xpose.msra.mxu0 0
    %601 = vmatprep.subr.bf16.mxu0 0
    %602 = vmatpush2.bf16.xpose.msra.mxu0 0
    %603 = vmatprep.subr.bf16.mxu0 0
    %604 = vmatpush2.bf16.xpose.msra.mxu0 0
    %605 = vmatprep.mubr.bf16.mxu0 0
    %606 = vmatmul.mubr.bf16.gmra.mxu0 %v568
    %v607 = vpop.f32.mrf.mxu0
    %v608 = vadd.f32 0.0, %v607
    %v609 = vpop.f32.mrf.mxu0
    %v610 = vpop.f32.mrf.mxu0
    %v611 = vpop.f32.mrf.mxu0
    %612 = vdwg.mxu0
    %v613 = vsel %vm337, %v608, -inf
    %614 = vmax.xlane.f32.xlu0 %v613
    %v615 = vpop.xlane.xlu0 %614
    %v616 = vsub.f32 %v608, %v615
    %v617 = vmul.f32 %v616, 1.442695
    %v618 = vpow.pop %v617
    %v619 = vsel %vm337, %v618, 0.0
    %620 = vadd.xlane.f32.xlu0 %v619
    %v621 = vpop.xlane.xlu0 %620
    %v622 = vpack.c.bf16 %v618, %v618
    %623 = vrot.lane.b32.xlu0 %v336, 112
    %v624 = vpop.permute.xlu0 %623
    %v626 = vsel %vm337, %v622, 0
    %v629 = vsel %vm397, %v624, 0
    %631 = vmatprep.subr.bf16.mxu0 0
    %632 = vmatpush1.bf16.msra.mxu0 0
    %633 = vmatprep.subr.bf16.mxu0 0
    %634 = vmatpush1.bf16.msra.mxu0 0
    %635 = vmatprep.subr.bf16.mxu0 0
    %636 = vmatpush1.bf16.msra.mxu0 0
    %637 = vmatprep.subr.bf16.mxu0 0
    %638 = vmatpush1.bf16.msra.mxu0 0
    %639 = vmatprep.subr.bf16.mxu0 0
    %640 = vmatpush1.bf16.msra.mxu0 0
    %641 = vmatprep.subr.bf16.mxu0 0
    %642 = vmatpush1.bf16.msra.mxu0 0
    %643 = vmatprep.subr.bf16.mxu0 0
    %644 = vmatpush1.bf16.msra.mxu0 0
    %645 = vmatprep.subr.bf16.mxu0 0
    %646 = vmatpush1.bf16.msra.mxu0 %v629
    %647 = vmatprep.subr.bf16.mxu0 0
    %648 = vmatpush2.bf16.msra.mxu0 0
    %649 = vmatprep.subr.bf16.mxu0 0
    %650 = vmatpush2.bf16.msra.mxu0 0
    %651 = vmatprep.subr.bf16.mxu0 0
    %652 = vmatpush2.bf16.msra.mxu0 0
    %653 = vmatprep.subr.bf16.mxu0 0
    %654 = vmatpush2.bf16.msra.mxu0 0
    %655 = vmatprep.subr.bf16.mxu0 0
    %656 = vmatpush2.bf16.msra.mxu0 0
    %657 = vmatprep.subr.bf16.mxu0 0
    %658 = vmatpush2.bf16.msra.mxu0 0
    %659 = vmatprep.subr.bf16.mxu0 0
    %660 = vmatpush2.bf16.msra.mxu0 0
    %661 = vmatprep.subr.bf16.mxu0 0
    %662 = vmatpush2.bf16.msra.mxu0 0
    %663 = vmatprep.mubr.bf16.mxu0 0
    %664 = vmatmul.mubr.bf16.gmra.mxu0 %v626
    %v665 = vpop.f32.mrf.mxu0
    %v666 = vadd.f32 0.0, %v665
    %v667 = vpop.f32.mrf.mxu0
    %v668 = vpop.f32.mrf.mxu0
    %v669 = vpop.f32.mrf.mxu0
    %670 = vdwg.mxu0
    %v671 = vrcp.pop %v621
    %v672 = vmul.f32 %v666, %v671
    %674 = vrot.lane.b32.xlu0 %v672, 16
    %v675 = vpop.permute.xlu0 %674
    %vm677 = vcmask 195712
    %678 = vst.msk [vmem:[#allocation2] sm:$0xff] %vm677, %v675
    %679 = vrot.lane.b32.xlu0 %v334, 104
    %v680 = vpop.permute.xlu0 %679
    %681 = vrot.lane.b32.xlu0 %v335, 104
    %v682 = vpop.permute.xlu0 %681
    %v684 = vsel %vm337, %v680, 0
    %v687 = vsel %vm337, %v682, 0
    %689 = vmatprep.subr.bf16.mxu0 0
    %690 = vmatpush1.bf16.xpose.msra.mxu0 0
    %691 = vmatprep.subr.bf16.mxu0 0
    %692 = vmatpush1.bf16.xpose.msra.mxu0 0
    %693 = vmatprep.subr.bf16.mxu0 0
    %694 = vmatpush1.bf16.xpose.msra.mxu0 0
    %695 = vmatprep.subr.bf16.mxu0 0
    %696 = vmatpush1.bf16.xpose.msra.mxu0 0
    %697 = vmatprep.subr.bf16.mxu0 0
    %698 = vmatpush1.bf16.xpose.msra.mxu0 0
    %699 = vmatprep.subr.bf16.mxu0 0
    %700 = vmatpush1.bf16.xpose.msra.mxu0 0
    %701 = vmatprep.subr.bf16.mxu0 0
    %702 = vmatpush1.bf16.xpose.msra.mxu0 0
    %703 = vmatprep.subr.bf16.mxu0 0
    %704 = vmatpush1.bf16.xpose.msra.mxu0 %v687
    %705 = vmatprep.subr.bf16.mxu0 0
    %706 = vmatpush2.bf16.xpose.msra.mxu0 0
    %707 = vmatprep.subr.bf16.mxu0 0
    %708 = vmatpush2.bf16.xpose.msra.mxu0 0
    %709 = vmatprep.subr.bf16.mxu0 0
    %710 = vmatpush2.bf16.xpose.msra.mxu0 0
    %711 = vmatprep.subr.bf16.mxu0 0
    %712 = vmatpush2.bf16.xpose.msra.mxu0 0
    %713 = vmatprep.subr.bf16.mxu0 0
    %714 = vmatpush2.bf16.xpose.msra.mxu0 0
    %715 = vmatprep.subr.bf16.mxu0 0
    %716 = vmatpush2.bf16.xpose.msra.mxu0 0
    %717 = vmatprep.subr.bf16.mxu0 0
    %718 = vmatpush2.bf16.xpose.msra.mxu0 0
    %719 = vmatprep.subr.bf16.mxu0 0
    %720 = vmatpush2.bf16.xpose.msra.mxu0 0
    %721 = vmatprep.mubr.bf16.mxu0 0
    %722 = vmatmul.mubr.bf16.gmra.mxu0 %v684
    %v723 = vpop.f32.mrf.mxu0
    %v724 = vadd.f32 0.0, %v723
    %v725 = vpop.f32.mrf.mxu0
    %v726 = vpop.f32.mrf.mxu0
    %v727 = vpop.f32.mrf.mxu0
    %728 = vdwg.mxu0
    %v729 = vsel %vm337, %v724, -inf
    %730 = vmax.xlane.f32.xlu0 %v729
    %v731 = vpop.xlane.xlu0 %730
    %v732 = vsub.f32 %v724, %v731
    %v733 = vmul.f32 %v732, 1.442695
    %v734 = vpow.pop %v733
    %v735 = vsel %vm337, %v734, 0.0
    %736 = vadd.xlane.f32.xlu0 %v735
    %v737 = vpop.xlane.xlu0 %736
    %v738 = vpack.c.bf16 %v734, %v734
    %739 = vrot.lane.b32.xlu0 %v336, 104
    %v740 = vpop.permute.xlu0 %739
    %v742 = vsel %vm337, %v738, 0
    %v745 = vsel %vm397, %v740, 0
    %747 = vmatprep.subr.bf16.mxu0 0
    %748 = vmatpush1.bf16.msra.mxu0 0
    %749 = vmatprep.subr.bf16.mxu0 0
    %750 = vmatpush1.bf16.msra.mxu0 0
    %751 = vmatprep.subr.bf16.mxu0 0
    %752 = vmatpush1.bf16.msra.mxu0 0
    %753 = vmatprep.subr.bf16.mxu0 0
    %754 = vmatpush1.bf16.msra.mxu0 0
    %755 = vmatprep.subr.bf16.mxu0 0
    %756 = vmatpush1.bf16.msra.mxu0 0
    %757 = vmatprep.subr.bf16.mxu0 0
    %758 = vmatpush1.bf16.msra.mxu0 0
    %759 = vmatprep.subr.bf16.mxu0 0
    %760 = vmatpush1.bf16.msra.mxu0 0
    %761 = vmatprep.subr.bf16.mxu0 0
    %762 = vmatpush1.bf16.msra.mxu0 %v745
    %763 = vmatprep.subr.bf16.mxu0 0
    %764 = vmatpush2.bf16.msra.mxu0 0
    %765 = vmatprep.subr.bf16.mxu0 0
    %766 = vmatpush2.bf16.msra.mxu0 0
    %767 = vmatprep.subr.bf16.mxu0 0
    %768 = vmatpush2.bf16.msra.mxu0 0
    %769 = vmatprep.subr.bf16.mxu0 0
    %770 = vmatpush2.bf16.msra.mxu0 0
    %771 = vmatprep.subr.bf16.mxu0 0
    %772 = vmatpush2.bf16.msra.mxu0 0
    %773 = vmatprep.subr.bf16.mxu0 0
    %774 = vmatpush2.bf16.msra.mxu0 0
    %775 = vmatprep.subr.bf16.mxu0 0
    %776 = vmatpush2.bf16.msra.mxu0 0
    %777 = vmatprep.subr.bf16.mxu0 0
    %778 = vmatpush2.bf16.msra.mxu0 0
    %779 = vmatprep.mubr.bf16.mxu0 0
    %780 = vmatmul.mubr.bf16.gmra.mxu0 %v742
    %v781 = vpop.f32.mrf.mxu0
    %v782 = vadd.f32 0.0, %v781
    %v783 = vpop.f32.mrf.mxu0
    %v784 = vpop.f32.mrf.mxu0
    %v785 = vpop.f32.mrf.mxu0
    %786 = vdwg.mxu0
    %v787 = vrcp.pop %v737
    %v788 = vmul.f32 %v782, %v787
    %790 = vrot.lane.b32.xlu0 %v788, 24
    %v791 = vpop.permute.xlu0 %790
    %vm793 = vcmask 261312
    %794 = vst.msk [vmem:[#allocation2] sm:$0xff] %vm793, %v791
    %v795 = vrot.slane %v334, 4
    %v796 = vrot.slane %v335, 4
    %v798 = vsel %vm337, %v795, 0
    %v801 = vsel %vm337, %v796, 0
    %803 = vmatprep.subr.bf16.mxu0 0
    %804 = vmatpush1.bf16.xpose.msra.mxu0 0
    %805 = vmatprep.subr.bf16.mxu0 0
    %806 = vmatpush1.bf16.xpose.msra.mxu0 0
    %807 = vmatprep.subr.bf16.mxu0 0
    %808 = vmatpush1.bf16.xpose.msra.mxu0 0
    %809 = vmatprep.subr.bf16.mxu0 0
    %810 = vmatpush1.bf16.xpose.msra.mxu0 0
    %811 = vmatprep.subr.bf16.mxu0 0
    %812 = vmatpush1.bf16.xpose.msra.mxu0 0
    %813 = vmatprep.subr.bf16.mxu0 0
    %814 = vmatpush1.bf16.xpose.msra.mxu0 0
    %815 = vmatprep.subr.bf16.mxu0 0
    %816 = vmatpush1.bf16.xpose.msra.mxu0 0
    %817 = vmatprep.subr.bf16.mxu0 0
    %818 = vmatpush1.bf16.xpose.msra.mxu0 %v801
    %819 = vmatprep.subr.bf16.mxu0 0
    %820 = vmatpush2.bf16.xpose.msra.mxu0 0
    %821 = vmatprep.subr.bf16.mxu0 0
    %822 = vmatpush2.bf16.xpose.msra.mxu0 0
    %823 = vmatprep.subr.bf16.mxu0 0
    %824 = vmatpush2.bf16.xpose.msra.mxu0 0
    %825 = vmatprep.subr.bf16.mxu0 0
    %826 = vmatpush2.bf16.xpose.msra.mxu0 0
    %827 = vmatprep.subr.bf16.mxu0 0
    %828 = vmatpush2.bf16.xpose.msra.mxu0 0
    %829 = vmatprep.subr.bf16.mxu0 0
    %830 = vmatpush2.bf16.xpose.msra.mxu0 0
    %831 = vmatprep.subr.bf16.mxu0 0
    %832 = vmatpush2.bf16.xpose.msra.mxu0 0
    %833 = vmatprep.subr.bf16.mxu0 0
    %834 = vmatpush2.bf16.xpose.msra.mxu0 0
    %835 = vmatprep.mubr.bf16.mxu0 0
    %836 = vmatmul.mubr.bf16.gmra.mxu0 %v798
    %v837 = vpop.f32.mrf.mxu0
    %v838 = vadd.f32 0.0, %v837
    %v839 = vpop.f32.mrf.mxu0
    %v840 = vpop.f32.mrf.mxu0
    %v841 = vpop.f32.mrf.mxu0
    %842 = vdwg.mxu0
    %v843 = vsel %vm337, %v838, -inf
    %844 = vmax.xlane.f32.xlu0 %v843
    %v845 = vpop.xlane.xlu0 %844
    %v846 = vsub.f32 %v838, %v845
    %v847 = vmul.f32 %v846, 1.442695
    %v848 = vpow.pop %v847
    %v849 = vsel %vm337, %v848, 0.0
    %850 = vadd.xlane.f32.xlu0 %v849
    %v851 = vpop.xlane.xlu0 %850
    %v852 = vpack.c.bf16 %v848, %v848
    %v853 = vrot.slane %v336, 4
    %v855 = vsel %vm337, %v852, 0
    %v858 = vsel %vm397, %v853, 0
    %860 = vmatprep.subr.bf16.mxu0 0
    %861 = vmatpush1.bf16.msra.mxu0 0
    %862 = vmatprep.subr.bf16.mxu0 0
    %863 = vmatpush1.bf16.msra.mxu0 0
    %864 = vmatprep.subr.bf16.mxu0 0
    %865 = vmatpush1.bf16.msra.mxu0 0
    %866 = vmatprep.subr.bf16.mxu0 0
    %867 = vmatpush1.bf16.msra.mxu0 0
    %868 = vmatprep.subr.bf16.mxu0 0
    %869 = vmatpush1.bf16.msra.mxu0 0
    %870 = vmatprep.subr.bf16.mxu0 0
    %871 = vmatpush1.bf16.msra.mxu0 0
    %872 = vmatprep.subr.bf16.mxu0 0
    %873 = vmatpush1.bf16.msra.mxu0 0
    %874 = vmatprep.subr.bf16.mxu0 0
    %875 = vmatpush1.bf16.msra.mxu0 %v858
    %876 = vmatprep.subr.bf16.mxu0 0
    %877 = vmatpush2.bf16.msra.mxu0 0
    %878 = vmatprep.subr.bf16.mxu0 0
    %879 = vmatpush2.bf16.msra.mxu0 0
    %880 = vmatprep.subr.bf16.mxu0 0
    %881 = vmatpush2.bf16.msra.mxu0 0
    %882 = vmatprep.subr.bf16.mxu0 0
    %883 = vmatpush2.bf16.msra.mxu0 0
    %884 = vmatprep.subr.bf16.mxu0 0
    %885 = vmatpush2.bf16.msra.mxu0 0
    %886 = vmatprep.subr.bf16.mxu0 0
    %887 = vmatpush2.bf16.msra.mxu0 0
    %888 = vmatprep.subr.bf16.mxu0 0
    %889 = vmatpush2.bf16.msra.mxu0 0
    %890 = vmatprep.subr.bf16.mxu0 0
    %891 = vmatpush2.bf16.msra.mxu0 0
    %892 = vmatprep.mubr.bf16.mxu0 0
    %893 = vmatmul.mubr.bf16.gmra.mxu0 %v855
    %v894 = vpop.f32.mrf.mxu0
    %v895 = vadd.f32 0.0, %v894
    %v896 = vpop.f32.mrf.mxu0
    %v897 = vpop.f32.mrf.mxu0
    %v898 = vpop.f32.mrf.mxu0
    %899 = vdwg.mxu0
    %v900 = vrcp.pop %v851
    %v901 = vmul.f32 %v895, %v900
    %902 = vst.msk [vmem:[#allocation2 + $0x8] sm:$0xff] %vm337, %v901
    %903 = vrot.lane.b32.xlu0 %v795, 120
    %v904 = vpop.permute.xlu0 %903
    %905 = vrot.lane.b32.xlu0 %v796, 120
    %v906 = vpop.permute.xlu0 %905
    %v908 = vsel %vm337, %v904, 0
    %v911 = vsel %vm337, %v906, 0
    %913 = vmatprep.subr.bf16.mxu0 0
    %914 = vmatpush1.bf16.xpose.msra.mxu0 0
    %915 = vmatprep.subr.bf16.mxu0 0
    %916 = vmatpush1.bf16.xpose.msra.mxu0 0
    %917 = vmatprep.subr.bf16.mxu0 0
    %918 = vmatpush1.bf16.xpose.msra.mxu0 0
    %919 = vmatprep.subr.bf16.mxu0 0
    %920 = vmatpush1.bf16.xpose.msra.mxu0 0
    %921 = vmatprep.subr.bf16.mxu0 0
    %922 = vmatpush1.bf16.xpose.msra.mxu0 0
    %923 = vmatprep.subr.bf16.mxu0 0
    %924 = vmatpush1.bf16.xpose.msra.mxu0 0
    %925 = vmatprep.subr.bf16.mxu0 0
    %926 = vmatpush1.bf16.xpose.msra.mxu0 0
    %927 = vmatprep.subr.bf16.mxu0 0
    %928 = vmatpush1.bf16.xpose.msra.mxu0 %v911
    %929 = vmatprep.subr.bf16.mxu0 0
    %930 = vmatpush2.bf16.xpose.msra.mxu0 0
    %931 = vmatprep.subr.bf16.mxu0 0
    %932 = vmatpush2.bf16.xpose.msra.mxu0 0
    %933 = vmatprep.subr.bf16.mxu0 0
    %934 = vmatpush2.bf16.xpose.msra.mxu0 0
    %935 = vmatprep.subr.bf16.mxu0 0
    %936 = vmatpush2.bf16.xpose.msra.mxu0 0
    %937 = vmatprep.subr.bf16.mxu0 0
    %938 = vmatpush2.bf16.xpose.msra.mxu0 0
    %939 = vmatprep.subr.bf16.mxu0 0
    %940 = vmatpush2.bf16.xpose.msra.mxu0 0
    %941 = vmatprep.subr.bf16.mxu0 0
    %942 = vmatpush2.bf16.xpose.msra.mxu0 0
    %943 = vmatprep.subr.bf16.mxu0 0
    %944 = vmatpush2.bf16.xpose.msra.mxu0 0
    %945 = vmatprep.mubr.bf16.mxu0 0
    %946 = vmatmul.mubr.bf16.gmra.mxu0 %v908
    %v947 = vpop.f32.mrf.mxu0
    %v948 = vadd.f32 0.0, %v947
    %v949 = vpop.f32.mrf.mxu0
    %v950 = vpop.f32.mrf.mxu0
    %v951 = vpop.f32.mrf.mxu0
    %952 = vdwg.mxu0
    %v953 = vsel %vm337, %v948, -inf
    %954 = vmax.xlane.f32.xlu0 %v953
    %v955 = vpop.xlane.xlu0 %954
    %v956 = vsub.f32 %v948, %v955
    %v957 = vmul.f32 %v956, 1.442695
    %v958 = vpow.pop %v957
    %v959 = vsel %vm337, %v958, 0.0
    %960 = vadd.xlane.f32.xlu0 %v959
    %v961 = vpop.xlane.xlu0 %960
    %v962 = vpack.c.bf16 %v958, %v958
    %963 = vrot.lane.b32.xlu0 %v853, 120
    %v964 = vpop.permute.xlu0 %963
    %v966 = vsel %vm337, %v962, 0
    %v969 = vsel %vm397, %v964, 0
    %971 = vmatprep.subr.bf16.mxu0 0
    %972 = vmatpush1.bf16.msra.mxu0 0
    %973 = vmatprep.subr.bf16.mxu0 0
    %974 = vmatpush1.bf16.msra.mxu0 0
    %975 = vmatprep.subr.bf16.mxu0 0
    %976 = vmatpush1.bf16.msra.mxu0 0
    %977 = vmatprep.subr.bf16.mxu0 0
    %978 = vmatpush1.bf16.msra.mxu0 0
    %979 = vmatprep.subr.bf16.mxu0 0
    %980 = vmatpush1.bf16.msra.mxu0 0
    %981 = vmatprep.subr.bf16.mxu0 0
    %982 = vmatpush1.bf16.msra.mxu0 0
    %983 = vmatprep.subr.bf16.mxu0 0
    %984 = vmatpush1.bf16.msra.mxu0 0
    %985 = vmatprep.subr.bf16.mxu0 0
    %986 = vmatpush1.bf16.msra.mxu0 %v969
    %987 = vmatprep.subr.bf16.mxu0 0
    %988 = vmatpush2.bf16.msra.mxu0 0
    %989 = vmatprep.subr.bf16.mxu0 0
    %990 = vmatpush2.bf16.msra.mxu0 0
    %991 = vmatprep.subr.bf16.mxu0 0
    %992 = vmatpush2.bf16.msra.mxu0 0
    %993 = vmatprep.subr.bf16.mxu0 0
    %994 = vmatpush2.bf16.msra.mxu0 0
    %995 = vmatprep.subr.bf16.mxu0 0
    %996 = vmatpush2.bf16.msra.mxu0 0
    %997 = vmatprep.subr.bf16.mxu0 0
    %998 = vmatpush2.bf16.msra.mxu0 0
    %999 = vmatprep.subr.bf16.mxu0 0
    %1000 = vmatpush2.bf16.msra.mxu0 0
    %1001 = vmatprep.subr.bf16.mxu0 0
    %1002 = vmatpush2.bf16.msra.mxu0 0
    %1003 = vmatprep.mubr.bf16.mxu0 0
    %1004 = vmatmul.mubr.bf16.gmra.mxu0 %v966
    %v1005 = vpop.f32.mrf.mxu0
    %v1006 = vadd.f32 0.0, %v1005
    %v1007 = vpop.f32.mrf.mxu0
    %v1008 = vpop.f32.mrf.mxu0
    %v1009 = vpop.f32.mrf.mxu0
    %1010 = vdwg.mxu0
    %v1011 = vrcp.pop %v961
    %v1012 = vmul.f32 %v1006, %v1011
    %1014 = vrot.lane.b32.xlu0 %v1012, 8
    %v1015 = vpop.permute.xlu0 %1014
    %1017 = vst.msk [vmem:[#allocation2 + $0x8] sm:$0xff] %vm561, %v1015
    %1018 = vrot.lane.b32.xlu0 %v795, 112
    %v1019 = vpop.permute.xlu0 %1018
    %1020 = vrot.lane.b32.xlu0 %v796, 112
    %v1021 = vpop.permute.xlu0 %1020
    %v1023 = vsel %vm337, %v1019, 0
    %v1026 = vsel %vm337, %v1021, 0
    %1028 = vmatprep.subr.bf16.mxu0 0
    %1029 = vmatpush1.bf16.xpose.msra.mxu0 0
    %1030 = vmatprep.subr.bf16.mxu0 0
    %1031 = vmatpush1.bf16.xpose.msra.mxu0 0
    %1032 = vmatprep.subr.bf16.mxu0 0
    %1033 = vmatpush1.bf16.xpose.msra.mxu0 0
    %1034 = vmatprep.subr.bf16.mxu0 0
    %1035 = vmatpush1.bf16.xpose.msra.mxu0 0
    %1036 = vmatprep.subr.bf16.mxu0 0
    %1037 = vmatpush1.bf16.xpose.msra.mxu0 0
    %1038 = vmatprep.subr.bf16.mxu0 0
    %1039 = vmatpush1.bf16.xpose.msra.mxu0 0
    %1040 = vmatprep.subr.bf16.mxu0 0
    %1041 = vmatpush1.bf16.xpose.msra.mxu0 0
    %1042 = vmatprep.subr.bf16.mxu0 0
    %1043 = vmatpush1.bf16.xpose.msra.mxu0 %v1026
    %1044 = vmatprep.subr.bf16.mxu0 0
    %1045 = vmatpush2.bf16.xpose.msra.mxu0 0
    %1046 = vmatprep.subr.bf16.mxu0 0
    %1047 = vmatpush2.bf16.xpose.msra.mxu0 0
    %1048 = vmatprep.subr.bf16.mxu0 0
    %1049 = vmatpush2.bf16.xpose.msra.mxu0 0
    %1050 = vmatprep.subr.bf16.mxu0 0
    %1051 = vmatpush2.bf16.xpose.msra.mxu0 0
    %1052 = vmatprep.subr.bf16.mxu0 0
    %1053 = vmatpush2.bf16.xpose.msra.mxu0 0
    %1054 = vmatprep.subr.bf16.mxu0 0
    %1055 = vmatpush2.bf16.xpose.msra.mxu0 0
    %1056 = vmatprep.subr.bf16.mxu0 0
    %1057 = vmatpush2.bf16.xpose.msra.mxu0 0
    %1058 = vmatprep.subr.bf16.mxu0 0
    %1059 = vmatpush2.bf16.xpose.msra.mxu0 0
    %1060 = vmatprep.mubr.bf16.mxu0 0
    %1061 = vmatmul.mubr.bf16.gmra.mxu0 %v1023
    %v1062 = vpop.f32.mrf.mxu0
    %v1063 = vadd.f32 0.0, %v1062
    %v1064 = vpop.f32.mrf.mxu0
    %v1065 = vpop.f32.mrf.mxu0
    %v1066 = vpop.f32.mrf.mxu0
    %1067 = vdwg.mxu0
    %v1068 = vsel %vm337, %v1063, -inf
    %1069 = vmax.xlane.f32.xlu0 %v1068
    %v1070 = vpop.xlane.xlu0 %1069
    %v1071 = vsub.f32 %v1063, %v1070
    %v1072 = vmul.f32 %v1071, 1.442695
    %v1073 = vpow.pop %v1072
    %v1074 = vsel %vm337, %v1073, 0.0
    %1075 = vadd.xlane.f32.xlu0 %v1074
    %v1076 = vpop.xlane.xlu0 %1075
    %v1077 = vpack.c.bf16 %v1073, %v1073
    %1078 = vrot.lane.b32.xlu0 %v853, 112
    %v1079 = vpop.permute.xlu0 %1078
    %v1081 = vsel %vm337, %v1077, 0
    %v1084 = vsel %vm397, %v1079, 0
    %1086 = vmatprep.subr.bf16.mxu0 0
    %1087 = vmatpush1.bf16.msra.mxu0 0
    %1088 = vmatprep.subr.bf16.mxu0 0
    %1089 = vmatpush1.bf16.msra.mxu0 0
    %1090 = vmatprep.subr.bf16.mxu0 0
    %1091 = vmatpush1.bf16.msra.mxu0 0
    %1092 = vmatprep.subr.bf16.mxu0 0
    %1093 = vmatpush1.bf16.msra.mxu0 0
    %1094 = vmatprep.subr.bf16.mxu0 0
    %1095 = vmatpush1.bf16.msra.mxu0 0
    %1096 = vmatprep.subr.bf16.mxu0 0
    %1097 = vmatpush1.bf16.msra.mxu0 0
    %1098 = vmatprep.subr.bf16.mxu0 0
    %1099 = vmatpush1.bf16.msra.mxu0 0
    %1100 = vmatprep.subr.bf16.mxu0 0
    %1101 = vmatpush1.bf16.msra.mxu0 %v1084
    %1102 = vmatprep.subr.bf16.mxu0 0
    %1103 = vmatpush2.bf16.msra.mxu0 0
    %1104 = vmatprep.subr.bf16.mxu0 0
    %1105 = vmatpush2.bf16.msra.mxu0 0
    %1106 = vmatprep.subr.bf16.mxu0 0
    %1107 = vmatpush2.bf16.msra.mxu0 0
    %1108 = vmatprep.subr.bf16.mxu0 0
    %1109 = vmatpush2.bf16.msra.mxu0 0
    %1110 = vmatprep.subr.bf16.mxu0 0
    %1111 = vmatpush2.bf16.msra.mxu0 0
    %1112 = vmatprep.subr.bf16.mxu0 0
    %1113 = vmatpush2.bf16.msra.mxu0 0
    %1114 = vmatprep.subr.bf16.mxu0 0
    %1115 = vmatpush2.bf16.msra.mxu0 0
    %1116 = vmatprep.subr.bf16.mxu0 0
    %1117 = vmatpush2.bf16.msra.mxu0 0
    %1118 = vmatprep.mubr.bf16.mxu0 0
    %1119 = vmatmul.mubr.bf16.gmra.mxu0 %v1081
    %v1120 = vpop.f32.mrf.mxu0
    %v1121 = vadd.f32 0.0, %v1120
    %v1122 = vpop.f32.mrf.mxu0
    %v1123 = vpop.f32.mrf.mxu0
    %v1124 = vpop.f32.mrf.mxu0
    %1125 = vdwg.mxu0
    %v1126 = vrcp.pop %v1076
    %v1127 = vmul.f32 %v1121, %v1126
    %1129 = vrot.lane.b32.xlu0 %v1127, 16
    %v1130 = vpop.permute.xlu0 %1129
    %1132 = vst.msk [vmem:[#allocation2 + $0x8] sm:$0xff] %vm677, %v1130
    %1133 = vrot.lane.b32.xlu0 %v795, 104
    %v1134 = vpop.permute.xlu0 %1133
    %1135 = vrot.lane.b32.xlu0 %v796, 104
    %v1136 = vpop.permute.xlu0 %1135
    %v1138 = vsel %vm337, %v1134, 0
    %v1141 = vsel %vm337, %v1136, 0
    %1143 = vmatprep.subr.bf16.mxu0 0
    %1144 = vmatpush1.bf16.xpose.msra.mxu0 0
    %1145 = vmatprep.subr.bf16.mxu0 0
    %1146 = vmatpush1.bf16.xpose.msra.mxu0 0
    %1147 = vmatprep.subr.bf16.mxu0 0
    %1148 = vmatpush1.bf16.xpose.msra.mxu0 0
    %1149 = vmatprep.subr.bf16.mxu0 0
    %1150 = vmatpush1.bf16.xpose.msra.mxu0 0
    %1151 = vmatprep.subr.bf16.mxu0 0
    %1152 = vmatpush1.bf16.xpose.msra.mxu0 0
    %1153 = vmatprep.subr.bf16.mxu0 0
    %1154 = vmatpush1.bf16.xpose.msra.mxu0 0
    %1155 = vmatprep.subr.bf16.mxu0 0
    %1156 = vmatpush1.bf16.xpose.msra.mxu0 0
    %1157 = vmatprep.subr.bf16.mxu0 0
    %1158 = vmatpush1.bf16.xpose.msra.mxu0 %v1141
    %1159 = vmatprep.subr.bf16.mxu0 0
    %1160 = vmatpush2.bf16.xpose.msra.mxu0 0
    %1161 = vmatprep.subr.bf16.mxu0 0
    %1162 = vmatpush2.bf16.xpose.msra.mxu0 0
    %1163 = vmatprep.subr.bf16.mxu0 0
    %1164 = vmatpush2.bf16.xpose.msra.mxu0 0
    %1165 = vmatprep.subr.bf16.mxu0 0
    %1166 = vmatpush2.bf16.xpose.msra.mxu0 0
    %1167 = vmatprep.subr.bf16.mxu0 0
    %1168 = vmatpush2.bf16.xpose.msra.mxu0 0
    %1169 = vmatprep.subr.bf16.mxu0 0
    %1170 = vmatpush2.bf16.xpose.msra.mxu0 0
    %1171 = vmatprep.subr.bf16.mxu0 0
    %1172 = vmatpush2.bf16.xpose.msra.mxu0 0
    %1173 = vmatprep.subr.bf16.mxu0 0
    %1174 = vmatpush2.bf16.xpose.msra.mxu0 0
    %1175 = vmatprep.mubr.bf16.mxu0 0
    %1176 = vmatmul.mubr.bf16.gmra.mxu0 %v1138
    %v1177 = vpop.f32.mrf.mxu0
    %v1178 = vadd.f32 0.0, %v1177
    %v1179 = vpop.f32.mrf.mxu0
    %v1180 = vpop.f32.mrf.mxu0
    %v1181 = vpop.f32.mrf.mxu0
    %1182 = vdwg.mxu0
    %v1183 = vsel %vm337, %v1178, -inf
    %1184 = vmax.xlane.f32.xlu0 %v1183
    %v1185 = vpop.xlane.xlu0 %1184
    %v1186 = vsub.f32 %v1178, %v1185
    %v1187 = vmul.f32 %v1186, 1.442695
    %v1188 = vpow.pop %v1187
    %v1189 = vsel %vm337, %v1188, 0.0
    %1190 = vadd.xlane.f32.xlu0 %v1189
    %v1191 = vpop.xlane.xlu0 %1190
    %v1192 = vpack.c.bf16 %v1188, %v1188
    %1193 = vrot.lane.b32.xlu0 %v853, 104
    %v1194 = vpop.permute.xlu0 %1193
    %v1196 = vsel %vm337, %v1192, 0
    %v1199 = vsel %vm397, %v1194, 0
    %1201 = vmatprep.subr.bf16.mxu0 0
    %1202 = vmatpush1.bf16.msra.mxu0 0
    %1203 = vmatprep.subr.bf16.mxu0 0
    %1204 = vmatpush1.bf16.msra.mxu0 0
    %1205 = vmatprep.subr.bf16.mxu0 0
    %1206 = vmatpush1.bf16.msra.mxu0 0
    %1207 = vmatprep.subr.bf16.mxu0 0
    %1208 = vmatpush1.bf16.msra.mxu0 0
    %1209 = vmatprep.subr.bf16.mxu0 0
    %1210 = vmatpush1.bf16.msra.mxu0 0
    %1211 = vmatprep.subr.bf16.mxu0 0
    %1212 = vmatpush1.bf16.msra.mxu0 0
    %1213 = vmatprep.subr.bf16.mxu0 0
    %1214 = vmatpush1.bf16.msra.mxu0 0
    %1215 = vmatprep.subr.bf16.mxu0 0
    %1216 = vmatpush1.bf16.msra.mxu0 %v1199
    %1217 = vmatprep.subr.bf16.mxu0 0
    %1218 = vmatpush2.bf16.msra.mxu0 0
    %1219 = vmatprep.subr.bf16.mxu0 0
    %1220 = vmatpush2.bf16.msra.mxu0 0
    %1221 = vmatprep.subr.bf16.mxu0 0
    %1222 = vmatpush2.bf16.msra.mxu0 0
    %1223 = vmatprep.subr.bf16.mxu0 0
    %1224 = vmatpush2.bf16.msra.mxu0 0
    %1225 = vmatprep.subr.bf16.mxu0 0
    %1226 = vmatpush2.bf16.msra.mxu0 0
    %1227 = vmatprep.subr.bf16.mxu0 0
    %1228 = vmatpush2.bf16.msra.mxu0 0
    %1229 = vmatprep.subr.bf16.mxu0 0
    %1230 = vmatpush2.bf16.msra.mxu0 0
    %1231 = vmatprep.subr.bf16.mxu0 0
    %1232 = vmatpush2.bf16.msra.mxu0 0
    %1233 = vmatprep.mubr.bf16.mxu0 0
    %1234 = vmatmul.mubr.bf16.gmra.mxu0 %v1196
    %v1235 = vpop.f32.mrf.mxu0
    %v1236 = vadd.f32 0.0, %v1235
    %v1237 = vpop.f32.mrf.mxu0
    %v1238 = vpop.f32.mrf.mxu0
    %v1239 = vpop.f32.mrf.mxu0
    %1240 = vdwg.mxu0
    %v1241 = vrcp.pop %v1191
    %v1242 = vmul.f32 %v1236, %v1241
    %1244 = vrot.lane.b32.xlu0 %v1242, 24
    %v1245 = vpop.permute.xlu0 %1244
    %1247 = vst.msk [vmem:[#allocation2 + $0x8] sm:$0xff] %vm793, %v1245
    %v1248 = vld [vmem:[#allocation2] sm:$0xff]
    %v1249 = vld [vmem:[#allocation2 + $0x8] sm:$0xff]
    %v1250 = vpack.c.bf16 %v1249, %v1248
    %v1251 = vld [vmem:[#allocation12] sm:$0xf]
    %v1252 = vld [vmem:[#allocation12 + $0x4] sm:$0xf]
    %v1253 = vld [vmem:[#allocation12 + $0x8] sm:$0xf]
    %v1254 = vld [vmem:[#allocation12 + $0xc] sm:$0xf]
    %v1255 = vld [vmem:[%s9] sm:$0x1]
    %v1257 = vlaneseq
    %v1258 = vshrl.u32 %v1257, 7
    %v1259 = vsub.s32 0, %v1258
    %v1260 = vrot.slane %v1255, %v1259
    %v1266 = vunpack.c.l.b16 %v1251
    %v1267 = vunpack.c.l.b16 %v1252
    %v1268 = vunpack.c.l.b16 %v1253
    %v1269 = vunpack.c.l.b16 %v1254
    %v1270 = vpack.c.b16 %v1267, %v1266
    %v1271 = vpack.c.b16 %v1269, %v1268
    %v1275 = vsel %vm151, %v1250, 0
    %1277 = vmatprep.subr.bf16.mxu0 0
    %1278 = vmatpush1.bf16.msra.mxu0 0
    %1279 = vmatprep.subr.bf16.mxu0 0
    %1280 = vmatpush1.bf16.msra.mxu0 0
    %1281 = vmatprep.subr.bf16.mxu0 0
    %1282 = vmatpush1.bf16.msra.mxu0 0
    %1283 = vmatprep.subr.bf16.mxu0 0
    %1284 = vmatpush1.bf16.msra.mxu0 0
    %1285 = vmatprep.subr.bf16.mxu0 0
    %1286 = vmatpush1.bf16.msra.mxu0 0
    %1287 = vmatprep.subr.bf16.mxu0 0
    %1288 = vmatpush1.bf16.msra.mxu0 0
    %1289 = vmatprep.subr.bf16.mxu0 0
    %1290 = vmatpush1.bf16.msra.mxu0 %v1271
    %1291 = vmatprep.subr.bf16.mxu0 0
    %1292 = vmatpush1.bf16.msra.mxu0 %v1270
    %1293 = vmatprep.subr.bf16.mxu0 0
    %1294 = vmatpush2.bf16.msra.mxu0 0
    %1295 = vmatprep.subr.bf16.mxu0 0
    %1296 = vmatpush2.bf16.msra.mxu0 0
    %1297 = vmatprep.subr.bf16.mxu0 0
    %1298 = vmatpush2.bf16.msra.mxu0 0
    %1299 = vmatprep.subr.bf16.mxu0 0
    %1300 = vmatpush2.bf16.msra.mxu0 0
    %1301 = vmatprep.subr.bf16.mxu0 0
    %1302 = vmatpush2.bf16.msra.mxu0 0
    %1303 = vmatprep.subr.bf16.mxu0 0
    %1304 = vmatpush2.bf16.msra.mxu0 0
    %1305 = vmatprep.subr.bf16.mxu0 0
    %1306 = vmatpush2.bf16.msra.mxu0 0
    %1307 = vmatprep.subr.bf16.mxu0 0
    %1308 = vmatpush2.bf16.msra.mxu0 0
    %1309 = vmatprep.mubr.bf16.mxu0 0
    %1310 = vmatmul.mubr.bf16.gmra.mxu0 %v1275
    %v1311 = vpop.f32.mrf.mxu0
    %v1312 = vadd.f32 %v1260, %v1311
    %v1313 = vpop.f32.mrf.mxu0
    %v1314 = vpop.f32.mrf.mxu0
    %v1315 = vadd.f32 %v1260, %v1314
    %v1316 = vpop.f32.mrf.mxu0
    %1317 = vdwg.mxu0
    %1318 = vst.msk [vmem:[#allocation14] sm:$0xff] %vm151, %v1312
    %1319 = vst.msk [vmem:[#allocation14 + $0x8] sm:$0xff] %vm151, %v1315
    // Predicated region
    $region66: #{tpu_custom_call.1} parent=1 // pred_check
      _
    $region67: #{tpu_custom_call.1} parent=1 // pred_check_branch
      %1321 = sbr.rel (0) target = $region69
    $region68: #{tpu_custom_call.1} parent=1 // pred_region
      %s1323 = ssub.s32 256, 256
      %1324 = vsyncadd [#allocation5], %s1323
      %s1325 = sshll.u32 [#allocation14], 4
      %s1326 = int_to_ptr.vmem [resolvable:$true] %s1325
      %1331 = dma.vmem_to_hbm [thread:$0]  %s1326, 256, %s10, [#allocation5], 128, 128, 8
    $region69: #{tpu_custom_call.1} parent=1 // pred_fallthru
      _
    // Predicated region
    $region70: #{tpu_custom_call.1} parent=1 // pred_check
      _
    $region71: #{tpu_custom_call.1} parent=1 // pred_check_branch
      %1333 = sbr.rel (0) target = $region73
    $region72: #{tpu_custom_call.1} parent=1 // pred_region
      %1334 = dma.done [#allocation5], 256
    $region73: #{tpu_custom_call.1} parent=1 // pred_fallthru
      _
    %1335 = vsyncpa [#allocation4], 1
    %1336 = vsyncpa [#allocation7], 1
    %1337 = vsyncpa [#allocation10], 1
    %1338 = vsyncpa [#allocation13], 1
    %1339 = vsyncpa [#allocation5], 1

</llo_original>
